<compile_context>
chip_gen: v7x
topology: tpu7x:2x2x1
jax: 0.10.0
libtpu: 0.0.40
codegen_flags: <defaults>
</compile_context>

<pallas_src>
import math
from functools import partial

import jax
import jax.numpy as jnp
import numpy as np
from jax import lax
from jax.experimental import pallas as pl
from jax.experimental.pallas import tpu as pltpu

_LANE = 128
_SUBLANE = 8


def _spectral_contract_kernel(x_ref, w_ref, o_ref):
    """One (mode-tile m, input-channel-block k) grid step of
         out[b,o,m] = sum_i x[b,i,m] * w[i,o,m]        (complex, per mode)

    x_ref : (2, B, CT, mt)     stacked [re, im] spectrum slice, f32
    w_ref : (2, CT, Cout, mt)  stacked [re, im] weight slice, f32 or bf16
    o_ref : (2, B, Cout, mt)   f32 accumulator, VMEM-resident across k
    """
    k = pl.program_id(1)
    ct = x_ref.shape[2]

    acc_re = None
    acc_im = None
    # Fully unrolled static loop over the CIN_TILE channels of this block:
    # static ref slices are zero-cost views, partial sums accumulate in
    # vregs/values, and o_ref is touched only once per grid step.
    # TODO(synk): on v6e verify in the bundle dump how the x broadcast across
    # Cout (sublane axis) is materialized; switch to a stride-0 sublane
    # broadcast load if the compiler emits per-i copy filler.
    for i in range(ct):
        xr = x_ref[0, :, i, :][:, None, :]                       # (B, 1, mt)
        xi = x_ref[1, :, i, :][:, None, :]
        wr = w_ref[0, i, :, :].astype(jnp.float32)[None, :, :]   # (1, Cout, mt)
        wi = w_ref[1, i, :, :].astype(jnp.float32)[None, :, :]
        pr = xr * wr - xi * wi                                   # (B, Cout, mt)
        pi = xr * wi + xi * wr
        acc_re = pr if acc_re is None else acc_re + pr
        acc_im = pi if acc_im is None else acc_im + pi

    @pl.when(k == 0)
    def _store():
        o_ref[0] = acc_re
        o_ref[1] = acc_im

    @pl.when(k > 0)
    def _accumulate():
        o_ref[0] = o_ref[0] + acc_re
        o_ref[1] = o_ref[1] + acc_im


def _choose_mode_tiling(m, max_tile=512):
    """Lane-aligned (x128) mode tile size and padded mode count."""
    max_tile = max(_LANE, (max_tile // _LANE) * _LANE)
    m_lane = pl.cdiv(m, _LANE) * _LANE
    if m_lane <= max_tile:
        return m_lane, m_lane                    # single lane-aligned tile
    m_pad = pl.cdiv(m, max_tile) * max_tile
    return m_pad, max_tile


def _choose_cin_tiling(cin, max_tile=8):
    """Sublane-aligned (x8) input-channel tile and padded channel count."""
    max_tile = max(_SUBLANE, (max_tile // _SUBLANE) * _SUBLANE)
    if cin <= max_tile:
        return cin, cin                          # full-dim block is always legal
    cin_pad = pl.cdiv(cin, max_tile) * max_tile
    return cin_pad, max_tile


def prepare_spectral_weights(w_re, w_im, *, m_tile=512, cin_tile=8,
                             dtype=jnp.float32):
    """One-time weight relayout: stack re/im, flatten modes, pad to the kernel
    tiling and optionally downcast (bf16 halves HBM weight streaming; the
    kernel upcasts and accumulates in f32).

    Call this ONCE at parameter-init time -- never inside the jitted forward.
    w_re, w_im : (Cin, Cout, H, Wf)  ->  (2, Cin_pad, Cout, M_pad)
    """
    cin, cout, h, wf = w_re.shape
    m = h * wf
    m_pad, _ = _choose_mode_tiling(m, m_tile)
    cin_pad, _ = _choose_cin_tiling(cin, cin_tile)
    w = jnp.stack([w_re, w_im], axis=0).reshape(2, cin, cout, m)
    w = jnp.pad(w, ((0, 0), (0, cin_pad - cin), (0, 0), (0, m_pad - m)))
    return w.astype(dtype)


def spectral_contract(x_ri, w_ri, *, m_tile=512, cin_tile=8,
                      core_parallel_m=False):
    """out[:,b,o,m] = complex sum_i x[:,b,i,m] * w[:,i,o,m] as a Pallas kernel.

    x_ri : (2, B, Cin_pad, M_pad)   f32          stacked re/im spectrum
    w_ri : (2, Cin_pad, Cout, M_pad) f32 or bf16 stacked re/im diagonal weights
    returns (2, B, Cout, M_pad) f32
    """
    _, b, cin_pad, m_pad = x_ri.shape
    cout = w_ri.shape[2]
    _, mt = _choose_mode_tiling(m_pad, m_tile)
    _, ct = _choose_cin_tiling(cin_pad, cin_tile)
    assert m_pad % mt == 0 and cin_pad % ct == 0
    num_m, num_k = m_pad // mt, cin_pad // ct

    x_spec = pl.BlockSpec((2, b, ct, mt), lambda m, k: (0, 0, k, m))
    w_spec = pl.BlockSpec((2, ct, cout, mt), lambda m, k: (0, k, 0, m))
    o_spec = pl.BlockSpec((2, b, cout, mt), lambda m, k: (0, 0, 0, m))

    w_bytes = 2 * cin_pad * cout * m_pad * w_ri.dtype.itemsize
    x_bytes = 2 * b * cin_pad * m_pad * 4
    o_bytes = 2 * b * cout * m_pad * 4
    cost = pl.CostEstimate(flops=int(8 * b * cin_pad * cout * m_pad),
                           transcendentals=0,
                           bytes_accessed=int(w_bytes + x_bytes + o_bytes))

    # Per-step footprint: double-buffered x/w/out tiles (+ headroom for body
    # temporaries). Stays well inside v7x's 64 MiB physical VMEM at mt<=512.
    blk_bytes = (2 * b * ct * mt * 4
                 + 2 * ct * cout * mt * w_ri.dtype.itemsize
                 + 2 * b * cout * mt * 4)
    vmem_limit = int(min(max(4 * blk_bytes, 16 * 2**20), 48 * 2**20))

    # v7x: set core_parallel_m=True so the mode axis is really split across
    # the two TensorCores (plain "parallel" does not change codegen).
    m_sem = pltpu.CORE_PARALLEL if core_parallel_m else pltpu.PARALLEL

    return pl.pallas_call(
        _spectral_contract_kernel,
        grid=(num_m, num_k),                       # reduction axis (Cin) last
        in_specs=[x_spec, w_spec],
        out_specs=o_spec,
        out_shape=jax.ShapeDtypeStruct((2, b, cout, m_pad), jnp.float32),
        compiler_params=pltpu.CompilerParams(
            dimension_semantics=(m_sem, pltpu.ARBITRARY),
            vmem_limit_bytes=vmem_limit),
        cost_estimate=cost,
    )(x_ri, w_ri)


@partial(jax.jit, static_argnames=("m_tile", "cin_tile", "core_parallel_m"))
def spectral_filter_layer_forward(x, w_packed, *, m_tile=512, cin_tile=8,
                                  core_parallel_m=False):
    """SpectralFilterLayer.forward == SpectralConv.forward -> (y, residual)."""
    dtype = x.dtype
    residual = x                                   # same-resolution transforms
    xf = x.astype(jnp.float32)
    b, c, h, w = xf.shape
    wf = w // 2 + 1
    m = h * wf
    m_pad, _ = _choose_mode_tiling(m, m_tile)
    cin_pad, _ = _choose_cin_tiling(c, cin_tile)
    cout = w_packed.shape[2]
    if w_packed.shape != (2, cin_pad, cout, m_pad):
        raise ValueError(
            f"w_packed shape {w_packed.shape} does not match the expected "
            f"packed layout {(2, cin_pad, cout, m_pad)}; re-run "
            f"prepare_spectral_weights with the same m_tile/cin_tile.")

    # forward_transform: RealFFT2, full modes, ortho norm (no Pallas FFT).
    xs = jnp.fft.rfft2(xf, axes=(-2, -1), norm="ortho")          # (B,C,H,Wf)

    # Planar re/im split in the natural (B, Cin, M) layout (no channel/batch
    # transpose). Only the SMALL spectrum is padded per call -- the dominant
    # weight tensor was padded once at init.
    x_ri = jnp.stack([jnp.real(xs), jnp.imag(xs)], axis=0).reshape(2, b, c, m)
    pad_c, pad_m = cin_pad - c, m_pad - m
    if pad_c or pad_m:
        x_ri = jnp.pad(x_ri, ((0, 0), (0, 0), (0, pad_c), (0, pad_m)))

    out = spectral_contract(x_ri, w_packed, m_tile=m_tile, cin_tile=cin_tile,
                            core_parallel_m=core_parallel_m)     # (2,B,Cout,Mp)

    ys = lax.complex(out[0, :, :, :m], out[1, :, :, :m]).reshape(b, cout, h, wf)

    # inverse_transform: InverseRealFFT2, ortho norm.
    y = jnp.fft.irfft2(ys, s=(h, w), axes=(-2, -1), norm="ortho")
    return y.astype(dtype), residual


def init_spectral_conv_weights(key, embed_dim, H, W, gain=1.0):
    """Deterministic weight init mirroring SpectralConv (diagonal, non-separable)."""
    Wf = W // 2 + 1
    scale = math.sqrt(gain / embed_dim)
    kr, ki = jax.random.split(key)
    w_re = scale * jax.random.normal(kr, (embed_dim, embed_dim, H, Wf), jnp.float32)
    w_im = scale * jax.random.normal(ki, (embed_dim, embed_dim, H, Wf), jnp.float32)
    # m = 0 column of an rfft is "not really complex": sqrt(2) factor there.
    w_re = w_re.at[..., 0].multiply(math.sqrt(2.0))
    w_im = w_im.at[..., 0].multiply(math.sqrt(2.0))
    return w_re, w_im


def _reference_forward(x, w_re, w_im):
    """Pure-JAX reference for correctness checking."""
    xf = x.astype(jnp.float32)
    B, C, H, W = xf.shape
    xs = jnp.fft.rfft2(xf, axes=(-2, -1), norm="ortho")
    w = (w_re.astype(jnp.float32) + 1j * w_im.astype(jnp.float32)).astype(jnp.complex64)
    ys = jnp.einsum("bihm,iohm->bohm", xs, w)
    y = jnp.fft.irfft2(ys, s=(H, W), axes=(-2, -1), norm="ortho").astype(x.dtype)
    return y, x


if __name__ == "__main__":
    B, embed_dim, H, W = 2, 16, 16, 16

    key = jax.random.PRNGKey(0)
    kx, kw = jax.random.split(key)
    x = jax.random.normal(kx, (B, embed_dim, H, W), jnp.float32)
    w_re, w_im = init_spectral_conv_weights(kw, embed_dim, H, W, gain=1.0)

    # m_tile=128 / cin_tile=8 keep the tiny demo lane/sublane aligned while
    # still exercising multiple mode tiles AND the k>0 accumulation branch;
    # production sizes should use the defaults (m_tile=512).
    m_tile, cin_tile = 128, 8

    # One-time weight relayout (f32 for the tight check, bf16 streaming variant).
    w_f32 = prepare_spectral_weights(w_re, w_im, m_tile=m_tile,
                                     cin_tile=cin_tile, dtype=jnp.float32)
    w_bf16 = prepare_spectral_weights(w_re, w_im, m_tile=m_tile,
                                      cin_tile=cin_tile, dtype=jnp.bfloat16)

    y, residual = spectral_filter_layer_forward(x, w_f32, m_tile=m_tile,
                                                cin_tile=cin_tile)
    y = jax.block_until_ready(y)
    residual = jax.block_until_ready(residual)

    y_ref, res_ref = _reference_forward(x, w_re, w_im)
    assert y.shape == (B, embed_dim, H, W) and y.dtype == x.dtype
    np.testing.assert_allclose(np.asarray(y), np.asarray(y_ref), rtol=1e-4, atol=1e-4)
    np.testing.assert_allclose(np.asarray(residual), np.asarray(res_ref), rtol=0, atol=0)

    # bf16 weight streaming path: kernel upcasts to f32; compare against the
    # reference evaluated with the same bf16-rounded weights.
    y_bf, _ = spectral_filter_layer_forward(x, w_bf16, m_tile=m_tile,
                                            cin_tile=cin_tile)
    y_bf = jax.block_until_ready(y_bf)
    y_ref_bf, _ = _reference_forward(
        x,
        w_re.astype(jnp.bfloat16).astype(jnp.float32),
        w_im.astype(jnp.bfloat16).astype(jnp.float32))
    np.testing.assert_allclose(np.asarray(y_bf), np.asarray(y_ref_bf),
                               rtol=2e-4, atol=2e-4)

    print("KERNEL_OK")
</pallas_src>

<mosaic_0001>
module attributes {stable_mosaic.version = 11 : i64} {
  func.func @_spectral_contract_kernel(%arg0: i32, %arg1: i32, %arg2: memref<2x2x8x128xf32, #tpu.memory_space<vmem>>, %arg3: memref<2x8x16x128xf32, #tpu.memory_space<vmem>>, %arg4: memref<2x2x16x128xf32, #tpu.memory_space<vmem>>) attributes {dimension_semantics = [#tpu.dimension_semantics<parallel>, #tpu.dimension_semantics<arbitrary>], iteration_bounds = array<i64: 2, 2>, scalar_prefetch = 0 : i64, scratch_operands = 0 : i64, tpu.core_type = #tpu.core_type<tc>, window_params = [{transform_indices = @transform_0, window_bounds = array<i64: 2, 2, 8, 128>}, {transform_indices = @transform_1, window_bounds = array<i64: 2, 8, 16, 128>}, {transform_indices = @transform_2, window_bounds = array<i64: 2, 2, 16, 128>}]} {
    %c0 = arith.constant 0 : index
    %c0_0 = arith.constant 0 : index
    %c0_1 = arith.constant 0 : index
    %c0_2 = arith.constant 0 : index
    %0 = vector.load %arg2[%c0, %c0_0, %c0_1, %c0_2] : memref<2x2x8x128xf32, #tpu.memory_space<vmem>>, vector<1x2x1x128xf32>
    %1 = vector.shape_cast %0 : vector<1x2x1x128xf32> to vector<2x128xf32>
    %2 = vector.shape_cast %1 : vector<2x128xf32> to vector<2x1x128xf32>
    %c1 = arith.constant 1 : index
    %c0_3 = arith.constant 0 : index
    %c0_4 = arith.constant 0 : index
    %c0_5 = arith.constant 0 : index
    %3 = vector.load %arg2[%c1, %c0_3, %c0_4, %c0_5] : memref<2x2x8x128xf32, #tpu.memory_space<vmem>>, vector<1x2x1x128xf32>
    %4 = vector.shape_cast %3 : vector<1x2x1x128xf32> to vector<2x128xf32>
    %5 = vector.shape_cast %4 : vector<2x128xf32> to vector<2x1x128xf32>
    %c0_6 = arith.constant 0 : index
    %c0_7 = arith.constant 0 : index
    %c0_8 = arith.constant 0 : index
    %c0_9 = arith.constant 0 : index
    %6 = vector.load %arg3[%c0_6, %c0_7, %c0_8, %c0_9] : memref<2x8x16x128xf32, #tpu.memory_space<vmem>>, vector<1x1x16x128xf32>
    %7 = vector.shape_cast %6 : vector<1x1x16x128xf32> to vector<16x128xf32>
    %8 = vector.shape_cast %7 : vector<16x128xf32> to vector<1x16x128xf32>
    %c1_10 = arith.constant 1 : index
    %c0_11 = arith.constant 0 : index
    %c0_12 = arith.constant 0 : index
    %c0_13 = arith.constant 0 : index
    %9 = vector.load %arg3[%c1_10, %c0_11, %c0_12, %c0_13] : memref<2x8x16x128xf32, #tpu.memory_space<vmem>>, vector<1x1x16x128xf32>
    %10 = vector.shape_cast %9 : vector<1x1x16x128xf32> to vector<16x128xf32>
    %11 = vector.shape_cast %10 : vector<16x128xf32> to vector<1x16x128xf32>
    %12 = vector.broadcast %2 : vector<2x1x128xf32> to vector<2x16x128xf32>
    %13 = vector.broadcast %8 : vector<1x16x128xf32> to vector<2x16x128xf32>
    %14 = arith.mulf %12, %13 : vector<2x16x128xf32>
    %15 = vector.broadcast %5 : vector<2x1x128xf32> to vector<2x16x128xf32>
    %16 = vector.broadcast %11 : vector<1x16x128xf32> to vector<2x16x128xf32>
    %17 = arith.mulf %15, %16 : vector<2x16x128xf32>
    %18 = arith.subf %14, %17 : vector<2x16x128xf32>
    %19 = vector.broadcast %2 : vector<2x1x128xf32> to vector<2x16x128xf32>
    %20 = vector.broadcast %11 : vector<1x16x128xf32> to vector<2x16x128xf32>
    %21 = arith.mulf %19, %20 : vector<2x16x128xf32>
    %22 = vector.broadcast %5 : vector<2x1x128xf32> to vector<2x16x128xf32>
    %23 = vector.broadcast %8 : vector<1x16x128xf32> to vector<2x16x128xf32>
    %24 = arith.mulf %22, %23 : vector<2x16x128xf32>
    %25 = arith.addf %21, %24 : vector<2x16x128xf32>
    %c0_14 = arith.constant 0 : index
    %c0_15 = arith.constant 0 : index
    %c1_16 = arith.constant 1 : index
    %c0_17 = arith.constant 0 : index
    %26 = vector.load %arg2[%c0_14, %c0_15, %c1_16, %c0_17] : memref<2x2x8x128xf32, #tpu.memory_space<vmem>>, vector<1x2x1x128xf32>
    %27 = vector.shape_cast %26 : vector<1x2x1x128xf32> to vector<2x128xf32>
    %28 = vector.shape_cast %27 : vector<2x128xf32> to vector<2x1x128xf32>
    %c1_18 = arith.constant 1 : index
    %c0_19 = arith.constant 0 : index
    %c1_20 = arith.constant 1 : index
    %c0_21 = arith.constant 0 : index
    %29 = vector.load %arg2[%c1_18, %c0_19, %c1_20, %c0_21] : memref<2x2x8x128xf32, #tpu.memory_space<vmem>>, vector<1x2x1x128xf32>
    %30 = vector.shape_cast %29 : vector<1x2x1x128xf32> to vector<2x128xf32>
    %31 = vector.shape_cast %30 : vector<2x128xf32> to vector<2x1x128xf32>
    %c0_22 = arith.constant 0 : index
    %c1_23 = arith.constant 1 : index
    %c0_24 = arith.constant 0 : index
    %c0_25 = arith.constant 0 : index
    %32 = vector.load %arg3[%c0_22, %c1_23, %c0_24, %c0_25] : memref<2x8x16x128xf32, #tpu.memory_space<vmem>>, vector<1x1x16x128xf32>
    %33 = vector.shape_cast %32 : vector<1x1x16x128xf32> to vector<16x128xf32>
    %34 = vector.shape_cast %33 : vector<16x128xf32> to vector<1x16x128xf32>
    %c1_26 = arith.constant 1 : index
    %c1_27 = arith.constant 1 : index
    %c0_28 = arith.constant 0 : index
    %c0_29 = arith.constant 0 : index
    %35 = vector.load %arg3[%c1_26, %c1_27, %c0_28, %c0_29] : memref<2x8x16x128xf32, #tpu.memory_space<vmem>>, vector<1x1x16x128xf32>
    %36 = vector.shape_cast %35 : vector<1x1x16x128xf32> to vector<16x128xf32>
    %37 = vector.shape_cast %36 : vector<16x128xf32> to vector<1x16x128xf32>
    %38 = vector.broadcast %28 : vector<2x1x128xf32> to vector<2x16x128xf32>
    %39 = vector.broadcast %34 : vector<1x16x128xf32> to vector<2x16x128xf32>
    %40 = arith.mulf %38, %39 : vector<2x16x128xf32>
    %41 = vector.broadcast %31 : vector<2x1x128xf32> to vector<2x16x128xf32>
    %42 = vector.broadcast %37 : vector<1x16x128xf32> to vector<2x16x128xf32>
    %43 = arith.mulf %41, %42 : vector<2x16x128xf32>
    %44 = arith.subf %40, %43 : vector<2x16x128xf32>
    %45 = vector.broadcast %28 : vector<2x1x128xf32> to vector<2x16x128xf32>
    %46 = vector.broadcast %37 : vector<1x16x128xf32> to vector<2x16x128xf32>
    %47 = arith.mulf %45, %46 : vector<2x16x128xf32>
    %48 = vector.broadcast %31 : vector<2x1x128xf32> to vector<2x16x128xf32>
    %49 = vector.broadcast %34 : vector<1x16x128xf32> to vector<2x16x128xf32>
    %50 = arith.mulf %48, %49 : vector<2x16x128xf32>
    %51 = arith.addf %47, %50 : vector<2x16x128xf32>
    %52 = arith.addf %18, %44 : vector<2x16x128xf32>
    %53 = arith.addf %25, %51 : vector<2x16x128xf32>
    %c0_30 = arith.constant 0 : index
    %c0_31 = arith.constant 0 : index
    %c2 = arith.constant 2 : index
    %c0_32 = arith.constant 0 : index
    %54 = vector.load %arg2[%c0_30, %c0_31, %c2, %c0_32] : memref<2x2x8x128xf32, #tpu.memory_space<vmem>>, vector<1x2x1x128xf32>
    %55 = vector.shape_cast %54 : vector<1x2x1x128xf32> to vector<2x128xf32>
    %56 = vector.shape_cast %55 : vector<2x128xf32> to vector<2x1x128xf32>
    %c1_33 = arith.constant 1 : index
    %c0_34 = arith.constant 0 : index
    %c2_35 = arith.constant 2 : index
    %c0_36 = arith.constant 0 : index
    %57 = vector.load %arg2[%c1_33, %c0_34, %c2_35, %c0_36] : memref<2x2x8x128xf32, #tpu.memory_space<vmem>>, vector<1x2x1x128xf32>
    %58 = vector.shape_cast %57 : vector<1x2x1x128xf32> to vector<2x128xf32>
    %59 = vector.shape_cast %58 : vector<2x128xf32> to vector<2x1x128xf32>
    %c0_37 = arith.constant 0 : index
    %c2_38 = arith.constant 2 : index
    %c0_39 = arith.constant 0 : index
    %c0_40 = arith.constant 0 : index
    %60 = vector.load %arg3[%c0_37, %c2_38, %c0_39, %c0_40] : memref<2x8x16x128xf32, #tpu.memory_space<vmem>>, vector<1x1x16x128xf32>
    %61 = vector.shape_cast %60 : vector<1x1x16x128xf32> to vector<16x128xf32>
    %62 = vector.shape_cast %61 : vector<16x128xf32> to vector<1x16x128xf32>
    %c1_41 = arith.constant 1 : index
    %c2_42 = arith.constant 2 : index
    %c0_43 = arith.constant 0 : index
    %c0_44 = arith.constant 0 : index
    %63 = vector.load %arg3[%c1_41, %c2_42, %c0_43, %c0_44] : memref<2x8x16x128xf32, #tpu.memory_space<vmem>>, vector<1x1x16x128xf32>
    %64 = vector.shape_cast %63 : vector<1x1x16x128xf32> to vector<16x128xf32>
    %65 = vector.shape_cast %64 : vector<16x128xf32> to vector<1x16x128xf32>
    %66 = vector.broadcast %56 : vector<2x1x128xf32> to vector<2x16x128xf32>
    %67 = vector.broadcast %62 : vector<1x16x128xf32> to vector<2x16x128xf32>
    %68 = arith.mulf %66, %67 : vector<2x16x128xf32>
    %69 = vector.broadcast %59 : vector<2x1x128xf32> to vector<2x16x128xf32>
    %70 = vector.broadcast %65 : vector<1x16x128xf32> to vector<2x16x128xf32>
    %71 = arith.mulf %69, %70 : vector<2x16x128xf32>
    %72 = arith.subf %68, %71 : vector<2x16x128xf32>
    %73 = vector.broadcast %56 : vector<2x1x128xf32> to vector<2x16x128xf32>
    %74 = vector.broadcast %65 : vector<1x16x128xf32> to vector<2x16x128xf32>
    %75 = arith.mulf %73, %74 : vector<2x16x128xf32>
    %76 = vector.broadcast %59 : vector<2x1x128xf32> to vector<2x16x128xf32>
    %77 = vector.broadcast %62 : vector<1x16x128xf32> to vector<2x16x128xf32>
    %78 = arith.mulf %76, %77 : vector<2x16x128xf32>
    %79 = arith.addf %75, %78 : vector<2x16x128xf32>
    %80 = arith.addf %52, %72 : vector<2x16x128xf32>
    %81 = arith.addf %53, %79 : vector<2x16x128xf32>
    %c0_45 = arith.constant 0 : index
    %c0_46 = arith.constant 0 : index
    %c3 = arith.constant 3 : index
    %c0_47 = arith.constant 0 : index
    %82 = vector.load %arg2[%c0_45, %c0_46, %c3, %c0_47] : memref<2x2x8x128xf32, #tpu.memory_space<vmem>>, vector<1x2x1x128xf32>
    %83 = vector.shape_cast %82 : vector<1x2x1x128xf32> to vector<2x128xf32>
    %84 = vector.shape_cast %83 : vector<2x128xf32> to vector<2x1x128xf32>
    %c1_48 = arith.constant 1 : index
    %c0_49 = arith.constant 0 : index
    %c3_50 = arith.constant 3 : index
    %c0_51 = arith.constant 0 : index
    %85 = vector.load %arg2[%c1_48, %c0_49, %c3_50, %c0_51] : memref<2x2x8x128xf32, #tpu.memory_space<vmem>>, vector<1x2x1x128xf32>
    %86 = vector.shape_cast %85 : vector<1x2x1x128xf32> to vector<2x128xf32>
    %87 = vector.shape_cast %86 : vector<2x128xf32> to vector<2x1x128xf32>
    %c0_52 = arith.constant 0 : index
    %c3_53 = arith.constant 3 : index
    %c0_54 = arith.constant 0 : index
    %c0_55 = arith.constant 0 : index
    %88 = vector.load %arg3[%c0_52, %c3_53, %c0_54, %c0_55] : memref<2x8x16x128xf32, #tpu.memory_space<vmem>>, vector<1x1x16x128xf32>
    %89 = vector.shape_cast %88 : vector<1x1x16x128xf32> to vector<16x128xf32>
    %90 = vector.shape_cast %89 : vector<16x128xf32> to vector<1x16x128xf32>
    %c1_56 = arith.constant 1 : index
    %c3_57 = arith.constant 3 : index
    %c0_58 = arith.constant 0 : index
    %c0_59 = arith.constant 0 : index
    %91 = vector.load %arg3[%c1_56, %c3_57, %c0_58, %c0_59] : memref<2x8x16x128xf32, #tpu.memory_space<vmem>>, vector<1x1x16x128xf32>
    %92 = vector.shape_cast %91 : vector<1x1x16x128xf32> to vector<16x128xf32>
    %93 = vector.shape_cast %92 : vector<16x128xf32> to vector<1x16x128xf32>
    %94 = vector.broadcast %84 : vector<2x1x128xf32> to vector<2x16x128xf32>
    %95 = vector.broadcast %90 : vector<1x16x128xf32> to vector<2x16x128xf32>
    %96 = arith.mulf %94, %95 : vector<2x16x128xf32>
    %97 = vector.broadcast %87 : vector<2x1x128xf32> to vector<2x16x128xf32>
    %98 = vector.broadcast %93 : vector<1x16x128xf32> to vector<2x16x128xf32>
    %99 = arith.mulf %97, %98 : vector<2x16x128xf32>
    %100 = arith.subf %96, %99 : vector<2x16x128xf32>
    %101 = vector.broadcast %84 : vector<2x1x128xf32> to vector<2x16x128xf32>
    %102 = vector.broadcast %93 : vector<1x16x128xf32> to vector<2x16x128xf32>
    %103 = arith.mulf %101, %102 : vector<2x16x128xf32>
    %104 = vector.broadcast %87 : vector<2x1x128xf32> to vector<2x16x128xf32>
    %105 = vector.broadcast %90 : vector<1x16x128xf32> to vector<2x16x128xf32>
    %106 = arith.mulf %104, %105 : vector<2x16x128xf32>
    %107 = arith.addf %103, %106 : vector<2x16x128xf32>
    %108 = arith.addf %80, %100 : vector<2x16x128xf32>
    %109 = arith.addf %81, %107 : vector<2x16x128xf32>
    %c0_60 = arith.constant 0 : index
    %c0_61 = arith.constant 0 : index
    %c4 = arith.constant 4 : index
    %c0_62 = arith.constant 0 : index
    %110 = vector.load %arg2[%c0_60, %c0_61, %c4, %c0_62] : memref<2x2x8x128xf32, #tpu.memory_space<vmem>>, vector<1x2x1x128xf32>
    %111 = vector.shape_cast %110 : vector<1x2x1x128xf32> to vector<2x128xf32>
    %112 = vector.shape_cast %111 : vector<2x128xf32> to vector<2x1x128xf32>
    %c1_63 = arith.constant 1 : index
    %c0_64 = arith.constant 0 : index
    %c4_65 = arith.constant 4 : index
    %c0_66 = arith.constant 0 : index
    %113 = vector.load %arg2[%c1_63, %c0_64, %c4_65, %c0_66] : memref<2x2x8x128xf32, #tpu.memory_space<vmem>>, vector<1x2x1x128xf32>
    %114 = vector.shape_cast %113 : vector<1x2x1x128xf32> to vector<2x128xf32>
    %115 = vector.shape_cast %114 : vector<2x128xf32> to vector<2x1x128xf32>
    %c0_67 = arith.constant 0 : index
    %c4_68 = arith.constant 4 : index
    %c0_69 = arith.constant 0 : index
    %c0_70 = arith.constant 0 : index
    %116 = vector.load %arg3[%c0_67, %c4_68, %c0_69, %c0_70] : memref<2x8x16x128xf32, #tpu.memory_space<vmem>>, vector<1x1x16x128xf32>
    %117 = vector.shape_cast %116 : vector<1x1x16x128xf32> to vector<16x128xf32>
    %118 = vector.shape_cast %117 : vector<16x128xf32> to vector<1x16x128xf32>
    %c1_71 = arith.constant 1 : index
    %c4_72 = arith.constant 4 : index
    %c0_73 = arith.constant 0 : index
    %c0_74 = arith.constant 0 : index
    %119 = vector.load %arg3[%c1_71, %c4_72, %c0_73, %c0_74] : memref<2x8x16x128xf32, #tpu.memory_space<vmem>>, vector<1x1x16x128xf32>
    %120 = vector.shape_cast %119 : vector<1x1x16x128xf32> to vector<16x128xf32>
    %121 = vector.shape_cast %120 : vector<16x128xf32> to vector<1x16x128xf32>
    %122 = vector.broadcast %112 : vector<2x1x128xf32> to vector<2x16x128xf32>
    %123 = vector.broadcast %118 : vector<1x16x128xf32> to vector<2x16x128xf32>
    %124 = arith.mulf %122, %123 : vector<2x16x128xf32>
    %125 = vector.broadcast %115 : vector<2x1x128xf32> to vector<2x16x128xf32>
    %126 = vector.broadcast %121 : vector<1x16x128xf32> to vector<2x16x128xf32>
    %127 = arith.mulf %125, %126 : vector<2x16x128xf32>
    %128 = arith.subf %124, %127 : vector<2x16x128xf32>
    %129 = vector.broadcast %112 : vector<2x1x128xf32> to vector<2x16x128xf32>
    %130 = vector.broadcast %121 : vector<1x16x128xf32> to vector<2x16x128xf32>
    %131 = arith.mulf %129, %130 : vector<2x16x128xf32>
    %132 = vector.broadcast %115 : vector<2x1x128xf32> to vector<2x16x128xf32>
    %133 = vector.broadcast %118 : vector<1x16x128xf32> to vector<2x16x128xf32>
    %134 = arith.mulf %132, %133 : vector<2x16x128xf32>
    %135 = arith.addf %131, %134 : vector<2x16x128xf32>
    %136 = arith.addf %108, %128 : vector<2x16x128xf32>
    %137 = arith.addf %109, %135 : vector<2x16x128xf32>
    %c0_75 = arith.constant 0 : index
    %c0_76 = arith.constant 0 : index
    %c5 = arith.constant 5 : index
    %c0_77 = arith.constant 0 : index
    %138 = vector.load %arg2[%c0_75, %c0_76, %c5, %c0_77] : memref<2x2x8x128xf32, #tpu.memory_space<vmem>>, vector<1x2x1x128xf32>
    %139 = vector.shape_cast %138 : vector<1x2x1x128xf32> to vector<2x128xf32>
    %140 = vector.shape_cast %139 : vector<2x128xf32> to vector<2x1x128xf32>
    %c1_78 = arith.constant 1 : index
    %c0_79 = arith.constant 0 : index
    %c5_80 = arith.constant 5 : index
    %c0_81 = arith.constant 0 : index
    %141 = vector.load %arg2[%c1_78, %c0_79, %c5_80, %c0_81] : memref<2x2x8x128xf32, #tpu.memory_space<vmem>>, vector<1x2x1x128xf32>
    %142 = vector.shape_cast %141 : vector<1x2x1x128xf32> to vector<2x128xf32>
    %143 = vector.shape_cast %142 : vector<2x128xf32> to vector<2x1x128xf32>
    %c0_82 = arith.constant 0 : index
    %c5_83 = arith.constant 5 : index
    %c0_84 = arith.constant 0 : index
    %c0_85 = arith.constant 0 : index
    %144 = vector.load %arg3[%c0_82, %c5_83, %c0_84, %c0_85] : memref<2x8x16x128xf32, #tpu.memory_space<vmem>>, vector<1x1x16x128xf32>
    %145 = vector.shape_cast %144 : vector<1x1x16x128xf32> to vector<16x128xf32>
    %146 = vector.shape_cast %145 : vector<16x128xf32> to vector<1x16x128xf32>
    %c1_86 = arith.constant 1 : index
    %c5_87 = arith.constant 5 : index
    %c0_88 = arith.constant 0 : index
    %c0_89 = arith.constant 0 : index
    %147 = vector.load %arg3[%c1_86, %c5_87, %c0_88, %c0_89] : memref<2x8x16x128xf32, #tpu.memory_space<vmem>>, vector<1x1x16x128xf32>
    %148 = vector.shape_cast %147 : vector<1x1x16x128xf32> to vector<16x128xf32>
    %149 = vector.shape_cast %148 : vector<16x128xf32> to vector<1x16x128xf32>
    %150 = vector.broadcast %140 : vector<2x1x128xf32> to vector<2x16x128xf32>
    %151 = vector.broadcast %146 : vector<1x16x128xf32> to vector<2x16x128xf32>
    %152 = arith.mulf %150, %151 : vector<2x16x128xf32>
    %153 = vector.broadcast %143 : vector<2x1x128xf32> to vector<2x16x128xf32>
    %154 = vector.broadcast %149 : vector<1x16x128xf32> to vector<2x16x128xf32>
    %155 = arith.mulf %153, %154 : vector<2x16x128xf32>
    %156 = arith.subf %152, %155 : vector<2x16x128xf32>
    %157 = vector.broadcast %140 : vector<2x1x128xf32> to vector<2x16x128xf32>
    %158 = vector.broadcast %149 : vector<1x16x128xf32> to vector<2x16x128xf32>
    %159 = arith.mulf %157, %158 : vector<2x16x128xf32>
    %160 = vector.broadcast %143 : vector<2x1x128xf32> to vector<2x16x128xf32>
    %161 = vector.broadcast %146 : vector<1x16x128xf32> to vector<2x16x128xf32>
    %162 = arith.mulf %160, %161 : vector<2x16x128xf32>
    %163 = arith.addf %159, %162 : vector<2x16x128xf32>
    %164 = arith.addf %136, %156 : vector<2x16x128xf32>
    %165 = arith.addf %137, %163 : vector<2x16x128xf32>
    %c0_90 = arith.constant 0 : index
    %c0_91 = arith.constant 0 : index
    %c6 = arith.constant 6 : index
    %c0_92 = arith.constant 0 : index
    %166 = vector.load %arg2[%c0_90, %c0_91, %c6, %c0_92] : memref<2x2x8x128xf32, #tpu.memory_space<vmem>>, vector<1x2x1x128xf32>
    %167 = vector.shape_cast %166 : vector<1x2x1x128xf32> to vector<2x128xf32>
    %168 = vector.shape_cast %167 : vector<2x128xf32> to vector<2x1x128xf32>
    %c1_93 = arith.constant 1 : index
    %c0_94 = arith.constant 0 : index
    %c6_95 = arith.constant 6 : index
    %c0_96 = arith.constant 0 : index
    %169 = vector.load %arg2[%c1_93, %c0_94, %c6_95, %c0_96] : memref<2x2x8x128xf32, #tpu.memory_space<vmem>>, vector<1x2x1x128xf32>
    %170 = vector.shape_cast %169 : vector<1x2x1x128xf32> to vector<2x128xf32>
    %171 = vector.shape_cast %170 : vector<2x128xf32> to vector<2x1x128xf32>
    %c0_97 = arith.constant 0 : index
    %c6_98 = arith.constant 6 : index
    %c0_99 = arith.constant 0 : index
    %c0_100 = arith.constant 0 : index
    %172 = vector.load %arg3[%c0_97, %c6_98, %c0_99, %c0_100] : memref<2x8x16x128xf32, #tpu.memory_space<vmem>>, vector<1x1x16x128xf32>
    %173 = vector.shape_cast %172 : vector<1x1x16x128xf32> to vector<16x128xf32>
    %174 = vector.shape_cast %173 : vector<16x128xf32> to vector<1x16x128xf32>
    %c1_101 = arith.constant 1 : index
    %c6_102 = arith.constant 6 : index
    %c0_103 = arith.constant 0 : index
    %c0_104 = arith.constant 0 : index
    %175 = vector.load %arg3[%c1_101, %c6_102, %c0_103, %c0_104] : memref<2x8x16x128xf32, #tpu.memory_space<vmem>>, vector<1x1x16x128xf32>
    %176 = vector.shape_cast %175 : vector<1x1x16x128xf32> to vector<16x128xf32>
    %177 = vector.shape_cast %176 : vector<16x128xf32> to vector<1x16x128xf32>
    %178 = vector.broadcast %168 : vector<2x1x128xf32> to vector<2x16x128xf32>
    %179 = vector.broadcast %174 : vector<1x16x128xf32> to vector<2x16x128xf32>
    %180 = arith.mulf %178, %179 : vector<2x16x128xf32>
    %181 = vector.broadcast %171 : vector<2x1x128xf32> to vector<2x16x128xf32>
    %182 = vector.broadcast %177 : vector<1x16x128xf32> to vector<2x16x128xf32>
    %183 = arith.mulf %181, %182 : vector<2x16x128xf32>
    %184 = arith.subf %180, %183 : vector<2x16x128xf32>
    %185 = vector.broadcast %168 : vector<2x1x128xf32> to vector<2x16x128xf32>
    %186 = vector.broadcast %177 : vector<1x16x128xf32> to vector<2x16x128xf32>
    %187 = arith.mulf %185, %186 : vector<2x16x128xf32>
    %188 = vector.broadcast %171 : vector<2x1x128xf32> to vector<2x16x128xf32>
    %189 = vector.broadcast %174 : vector<1x16x128xf32> to vector<2x16x128xf32>
    %190 = arith.mulf %188, %189 : vector<2x16x128xf32>
    %191 = arith.addf %187, %190 : vector<2x16x128xf32>
    %192 = arith.addf %164, %184 : vector<2x16x128xf32>
    %193 = arith.addf %165, %191 : vector<2x16x128xf32>
    %c0_105 = arith.constant 0 : index
    %c0_106 = arith.constant 0 : index
    %c7 = arith.constant 7 : index
    %c0_107 = arith.constant 0 : index
    %194 = vector.load %arg2[%c0_105, %c0_106, %c7, %c0_107] : memref<2x2x8x128xf32, #tpu.memory_space<vmem>>, vector<1x2x1x128xf32>
    %195 = vector.shape_cast %194 : vector<1x2x1x128xf32> to vector<2x128xf32>
    %196 = vector.shape_cast %195 : vector<2x128xf32> to vector<2x1x128xf32>
    %c1_108 = arith.constant 1 : index
    %c0_109 = arith.constant 0 : index
    %c7_110 = arith.constant 7 : index
    %c0_111 = arith.constant 0 : index
    %197 = vector.load %arg2[%c1_108, %c0_109, %c7_110, %c0_111] : memref<2x2x8x128xf32, #tpu.memory_space<vmem>>, vector<1x2x1x128xf32>
    %198 = vector.shape_cast %197 : vector<1x2x1x128xf32> to vector<2x128xf32>
    %199 = vector.shape_cast %198 : vector<2x128xf32> to vector<2x1x128xf32>
    %c0_112 = arith.constant 0 : index
    %c7_113 = arith.constant 7 : index
    %c0_114 = arith.constant 0 : index
    %c0_115 = arith.constant 0 : index
    %200 = vector.load %arg3[%c0_112, %c7_113, %c0_114, %c0_115] : memref<2x8x16x128xf32, #tpu.memory_space<vmem>>, vector<1x1x16x128xf32>
    %201 = vector.shape_cast %200 : vector<1x1x16x128xf32> to vector<16x128xf32>
    %202 = vector.shape_cast %201 : vector<16x128xf32> to vector<1x16x128xf32>
    %c1_116 = arith.constant 1 : index
    %c7_117 = arith.constant 7 : index
    %c0_118 = arith.constant 0 : index
    %c0_119 = arith.constant 0 : index
    %203 = vector.load %arg3[%c1_116, %c7_117, %c0_118, %c0_119] : memref<2x8x16x128xf32, #tpu.memory_space<vmem>>, vector<1x1x16x128xf32>
    %204 = vector.shape_cast %203 : vector<1x1x16x128xf32> to vector<16x128xf32>
    %205 = vector.shape_cast %204 : vector<16x128xf32> to vector<1x16x128xf32>
    %206 = vector.broadcast %196 : vector<2x1x128xf32> to vector<2x16x128xf32>
    %207 = vector.broadcast %202 : vector<1x16x128xf32> to vector<2x16x128xf32>
    %208 = arith.mulf %206, %207 : vector<2x16x128xf32>
    %209 = vector.broadcast %199 : vector<2x1x128xf32> to vector<2x16x128xf32>
    %210 = vector.broadcast %205 : vector<1x16x128xf32> to vector<2x16x128xf32>
    %211 = arith.mulf %209, %210 : vector<2x16x128xf32>
    %212 = arith.subf %208, %211 : vector<2x16x128xf32>
    %213 = vector.broadcast %196 : vector<2x1x128xf32> to vector<2x16x128xf32>
    %214 = vector.broadcast %205 : vector<1x16x128xf32> to vector<2x16x128xf32>
    %215 = arith.mulf %213, %214 : vector<2x16x128xf32>
    %216 = vector.broadcast %199 : vector<2x1x128xf32> to vector<2x16x128xf32>
    %217 = vector.broadcast %202 : vector<1x16x128xf32> to vector<2x16x128xf32>
    %218 = arith.mulf %216, %217 : vector<2x16x128xf32>
    %219 = arith.addf %215, %218 : vector<2x16x128xf32>
    %220 = arith.addf %192, %212 : vector<2x16x128xf32>
    %221 = arith.addf %193, %219 : vector<2x16x128xf32>
    %c0_i32 = arith.constant 0 : i32
    %222 = arith.cmpi eq, %arg1, %c0_i32 : i32
    %223 = arith.extui %222 : i1 to i32
    %c0_i32_120 = arith.constant 0 : i32
    %224 = arith.cmpi ne, %223, %c0_i32_120 : i32
    scf.if %224 {
      %c0_123 = arith.constant 0 : index
      %c0_124 = arith.constant 0 : index
      %c0_125 = arith.constant 0 : index
      %c0_126 = arith.constant 0 : index
      %228 = vector.load %arg4[%c0_123, %c0_124, %c0_125, %c0_126] : memref<2x2x16x128xf32, #tpu.memory_space<vmem>>, vector<1x2x16x128xf32>
      %229 = vector.shape_cast %228 : vector<1x2x16x128xf32> to vector<2x16x128xf32>
      %230 = vector.shape_cast %220 : vector<2x16x128xf32> to vector<1x2x16x128xf32>
      tpu.vector_store %arg4[%c0_123, %c0_124, %c0_125, %c0_126], %230 {strides = array<i32>} : memref<2x2x16x128xf32, #tpu.memory_space<vmem>>, vector<1x2x16x128xf32>,
      %c1_127 = arith.constant 1 : index
      %c0_128 = arith.constant 0 : index
      %c0_129 = arith.constant 0 : index
      %c0_130 = arith.constant 0 : index
      %231 = vector.load %arg4[%c1_127, %c0_128, %c0_129, %c0_130] : memref<2x2x16x128xf32, #tpu.memory_space<vmem>>, vector<1x2x16x128xf32>
      %232 = vector.shape_cast %231 : vector<1x2x16x128xf32> to vector<2x16x128xf32>
      %233 = vector.shape_cast %221 : vector<2x16x128xf32> to vector<1x2x16x128xf32>
      tpu.vector_store %arg4[%c1_127, %c0_128, %c0_129, %c0_130], %233 {strides = array<i32>} : memref<2x2x16x128xf32, #tpu.memory_space<vmem>>, vector<1x2x16x128xf32>,
    } else {
    }
    %c0_i32_121 = arith.constant 0 : i32
    %225 = arith.cmpi sgt, %arg1, %c0_i32_121 : i32
    %226 = arith.extui %225 : i1 to i32
    %c0_i32_122 = arith.constant 0 : i32
    %227 = arith.cmpi ne, %226, %c0_i32_122 : i32
    scf.if %227 {
      %c0_123 = arith.constant 0 : index
      %c0_124 = arith.constant 0 : index
      %c0_125 = arith.constant 0 : index
      %c0_126 = arith.constant 0 : index
      %228 = vector.load %arg4[%c0_123, %c0_124, %c0_125, %c0_126] : memref<2x2x16x128xf32, #tpu.memory_space<vmem>>, vector<1x2x16x128xf32>
      %229 = vector.shape_cast %228 : vector<1x2x16x128xf32> to vector<2x16x128xf32>
      %230 = arith.addf %229, %220 : vector<2x16x128xf32>
      %c0_127 = arith.constant 0 : index
      %c0_128 = arith.constant 0 : index
      %c0_129 = arith.constant 0 : index
      %c0_130 = arith.constant 0 : index
      %231 = vector.load %arg4[%c0_127, %c0_128, %c0_129, %c0_130] : memref<2x2x16x128xf32, #tpu.memory_space<vmem>>, vector<1x2x16x128xf32>
      %232 = vector.shape_cast %231 : vector<1x2x16x128xf32> to vector<2x16x128xf32>
      %233 = vector.shape_cast %230 : vector<2x16x128xf32> to vector<1x2x16x128xf32>
      tpu.vector_store %arg4[%c0_127, %c0_128, %c0_129, %c0_130], %233 {strides = array<i32>} : memref<2x2x16x128xf32, #tpu.memory_space<vmem>>, vector<1x2x16x128xf32>,
      %c1_131 = arith.constant 1 : index
      %c0_132 = arith.constant 0 : index
      %c0_133 = arith.constant 0 : index
      %c0_134 = arith.constant 0 : index
      %234 = vector.load %arg4[%c1_131, %c0_132, %c0_133, %c0_134] : memref<2x2x16x128xf32, #tpu.memory_space<vmem>>, vector<1x2x16x128xf32>
      %235 = vector.shape_cast %234 : vector<1x2x16x128xf32> to vector<2x16x128xf32>
      %236 = arith.addf %235, %221 : vector<2x16x128xf32>
      %c1_135 = arith.constant 1 : index
      %c0_136 = arith.constant 0 : index
      %c0_137 = arith.constant 0 : index
      %c0_138 = arith.constant 0 : index
      %237 = vector.load %arg4[%c1_135, %c0_136, %c0_137, %c0_138] : memref<2x2x16x128xf32, #tpu.memory_space<vmem>>, vector<1x2x16x128xf32>
      %238 = vector.shape_cast %237 : vector<1x2x16x128xf32> to vector<2x16x128xf32>
      %239 = vector.shape_cast %236 : vector<2x16x128xf32> to vector<1x2x16x128xf32>
      tpu.vector_store %arg4[%c1_135, %c0_136, %c0_137, %c0_138], %239 {strides = array<i32>} : memref<2x2x16x128xf32, #tpu.memory_space<vmem>>, vector<1x2x16x128xf32>,
    } else {
    }
    return
  }
  func.func @transform_0(%arg0: i32, %arg1: i32) -> (i32, i32, i32, i32) {
    %c0_i32 = arith.constant 0 : i32
    %c0_i32_0 = arith.constant 0 : i32
    %c0_i32_1 = arith.constant 0 : i32
    return %c0_i32, %c0_i32_0, %arg1, %arg0 : i32, i32, i32, i32
  }
  func.func @transform_1(%arg0: i32, %arg1: i32) -> (i32, i32, i32, i32) {
    %c0_i32 = arith.constant 0 : i32
    %c0_i32_0 = arith.constant 0 : i32
    %c0_i32_1 = arith.constant 0 : i32
    return %c0_i32, %arg1, %c0_i32_0, %arg0 : i32, i32, i32, i32
  }
  func.func @transform_2(%arg0: i32, %arg1: i32) -> (i32, i32, i32, i32) {
    %c0_i32 = arith.constant 0 : i32
    %c0_i32_0 = arith.constant 0 : i32
    %c0_i32_1 = arith.constant 0 : i32
    %c0_i32_2 = arith.constant 0 : i32
    return %c0_i32, %c0_i32_0, %c0_i32_1, %arg0 : i32, i32, i32, i32
  }
}

</mosaic_0001>

<llo_original>
// kernel: reverse.1
$region0: #{reverse.1}
  #allocation0 [shape = 's32[1]{0}', space=sflag, size = 0x4, scoped, tag = 'scoped memory for reverse.1']
  %s0 = inlined_call_operand.vmem [shape: f32[2,16,16,7], index: 0, kind: input, shape index: {}]
  %s1 = inlined_call_operand.vmem [shape: f32[2,16,16,7], index: 1, kind: output, shape index: {}]
  %s2 = scalar_lea.vmem %s0, 96
  %v3 = vld [vmem:[%s2] sm:$0xff]
  %4 = vst [vmem:[%s1] sm:$0xff] %v3
  %s5 = scalar_lea.vmem %s0, 208
  %v6 = vld [vmem:[%s5] sm:$0xff]
  %s7 = scalar_lea.vmem %s1, 112
  %8 = vst [vmem:[%s7] sm:$0xff] %v6
  %s9 = scalar_lea.vmem %s0, 80
  %v10 = vld [vmem:[%s9] sm:$0xff]
  %s11 = scalar_lea.vmem %s1, 16
  %12 = vst [vmem:[%s11] sm:$0xff] %v10
  %s13 = scalar_lea.vmem %s0, 192
  %v14 = vld [vmem:[%s13] sm:$0xff]
  %s15 = scalar_lea.vmem %s1, 128
  %16 = vst [vmem:[%s15] sm:$0xff] %v14
  %s17 = scalar_lea.vmem %s0, 64
  %v18 = vld [vmem:[%s17] sm:$0xff]
  %s19 = scalar_lea.vmem %s1, 32
  %20 = vst [vmem:[%s19] sm:$0xff] %v18
  %s21 = scalar_lea.vmem %s0, 176
  %v22 = vld [vmem:[%s21] sm:$0xff]
  %s23 = scalar_lea.vmem %s1, 144
  %24 = vst [vmem:[%s23] sm:$0xff] %v22
  %s25 = scalar_lea.vmem %s0, 48
  %v26 = vld [vmem:[%s25] sm:$0xff]
  %s27 = scalar_lea.vmem %s1, 48
  %28 = vst [vmem:[%s27] sm:$0xff] %v26
  %s29 = scalar_lea.vmem %s0, 160
  %v30 = vld [vmem:[%s29] sm:$0xff]
  %s31 = scalar_lea.vmem %s1, 160
  %32 = vst [vmem:[%s31] sm:$0xff] %v30
  %s33 = scalar_lea.vmem %s0, 32
  %v34 = vld [vmem:[%s33] sm:$0xff]
  %s35 = scalar_lea.vmem %s1, 64
  %36 = vst [vmem:[%s35] sm:$0xff] %v34
  %s37 = scalar_lea.vmem %s0, 144
  %v38 = vld [vmem:[%s37] sm:$0xff]
  %s39 = scalar_lea.vmem %s1, 176
  %40 = vst [vmem:[%s39] sm:$0xff] %v38
  %s41 = scalar_lea.vmem %s0, 16
  %v42 = vld [vmem:[%s41] sm:$0xff]
  %s43 = scalar_lea.vmem %s1, 80
  %44 = vst [vmem:[%s43] sm:$0xff] %v42
  %s45 = scalar_lea.vmem %s0, 128
  %v46 = vld [vmem:[%s45] sm:$0xff]
  %s47 = scalar_lea.vmem %s1, 192
  %48 = vst [vmem:[%s47] sm:$0xff] %v46
  %v49 = vld [vmem:[%s0] sm:$0xff]
  %s50 = scalar_lea.vmem %s1, 96
  %51 = vst [vmem:[%s50] sm:$0xff] %v49
  %s52 = scalar_lea.vmem %s0, 112
  %v53 = vld [vmem:[%s52] sm:$0xff]
  %s54 = scalar_lea.vmem %s1, 208
  %55 = vst [vmem:[%s54] sm:$0xff] %v53
  %s56 = scalar_lea.vmem %s0, 104
  %v57 = vld [vmem:[%s56] sm:$0xff]
  %s58 = scalar_lea.vmem %s1, 8
  %59 = vst [vmem:[%s58] sm:$0xff] %v57
  %s60 = scalar_lea.vmem %s0, 216
  %v61 = vld [vmem:[%s60] sm:$0xff]
  %s62 = scalar_lea.vmem %s1, 120
  %63 = vst [vmem:[%s62] sm:$0xff] %v61
  %s64 = scalar_lea.vmem %s0, 88
  %v65 = vld [vmem:[%s64] sm:$0xff]
  %s66 = scalar_lea.vmem %s1, 24
  %67 = vst [vmem:[%s66] sm:$0xff] %v65
  %s68 = scalar_lea.vmem %s0, 200
  %v69 = vld [vmem:[%s68] sm:$0xff]
  %s70 = scalar_lea.vmem %s1, 136
  %71 = vst [vmem:[%s70] sm:$0xff] %v69
  %s72 = scalar_lea.vmem %s0, 72
  %v73 = vld [vmem:[%s72] sm:$0xff]
  %s74 = scalar_lea.vmem %s1, 40
  %75 = vst [vmem:[%s74] sm:$0xff] %v73
  %s76 = scalar_lea.vmem %s0, 184
  %v77 = vld [vmem:[%s76] sm:$0xff]
  %s78 = scalar_lea.vmem %s1, 152
  %79 = vst [vmem:[%s78] sm:$0xff] %v77
  %s80 = scalar_lea.vmem %s0, 56
  %v81 = vld [vmem:[%s80] sm:$0xff]
  %s82 = scalar_lea.vmem %s1, 56
  %83 = vst [vmem:[%s82] sm:$0xff] %v81
  %s84 = scalar_lea.vmem %s0, 168
  %v85 = vld [vmem:[%s84] sm:$0xff]
  %s86 = scalar_lea.vmem %s1, 168
  %87 = vst [vmem:[%s86] sm:$0xff] %v85
  %s88 = scalar_lea.vmem %s0, 40
  %v89 = vld [vmem:[%s88] sm:$0xff]
  %s90 = scalar_lea.vmem %s1, 72
  %91 = vst [vmem:[%s90] sm:$0xff] %v89
  %s92 = scalar_lea.vmem %s0, 152
  %v93 = vld [vmem:[%s92] sm:$0xff]
  %s94 = scalar_lea.vmem %s1, 184
  %95 = vst [vmem:[%s94] sm:$0xff] %v93
  %s96 = scalar_lea.vmem %s0, 24
  %v97 = vld [vmem:[%s96] sm:$0xff]
  %s98 = scalar_lea.vmem %s1, 88
  %99 = vst [vmem:[%s98] sm:$0xff] %v97
  %s100 = scalar_lea.vmem %s0, 136
  %v101 = vld [vmem:[%s100] sm:$0xff]
  %s102 = scalar_lea.vmem %s1, 200
  %103 = vst [vmem:[%s102] sm:$0xff] %v101
  %s104 = scalar_lea.vmem %s0, 8
  %v105 = vld [vmem:[%s104] sm:$0xff]
  %s106 = scalar_lea.vmem %s1, 104
  %107 = vst [vmem:[%s106] sm:$0xff] %v105
  %s108 = scalar_lea.vmem %s0, 120
  %v109 = vld [vmem:[%s108] sm:$0xff]
  %s110 = scalar_lea.vmem %s1, 216
  %111 = vst [vmem:[%s110] sm:$0xff] %v109

// kernel: spectral_filter_layer_forward.1
$region0: #{spectral_filter_layer_forward.1}
  #allocation0 [shape = 'u32[]', space=smem, size = 0x4, offset = 0x4, fixed_abs, tag = 'smem constant byte address 0x4 - core index']
  #allocation1 [shape = 'u32[144,128]{1,0:T(1,128)}', space=vmem, size = 0x12000, scoped, tag = 'internal scratch']
  %s0 = inlined_call_operand.vmem [shape: f32[2,2,16,256], index: 0, kind: input, shape index: {}]
  %s1 = inlined_call_operand.vmem [shape: f32[2,16,16,256], index: 1, kind: input, shape index: {}]
  %s2 = inlined_call_operand.vmem [shape: f32[2,2,16,256], index: 2, kind: output, shape index: {}]
  %s3 = sld [smem:[#allocation0]]
  $region159: #{spectral_filter_layer_forward.1} parent=0
    _
  %s5 = ssub.s32 1, %s3
  %s6 = scalar_select 0, %s5, %s3
  $region1: #{spectral_filter_layer_forward.1} parent=0
    #allocation2 [shape = 'u8[32768]{0}', space=vmem, size = 0x8000, scoped, tag = 'input window, operand 0']
    #allocation3 [shape = 'u8[262144]{0}', space=vmem, size = 0x40000, scoped, tag = 'input window, operand 1']
    #allocation4 [shape = 'u8[65536]{0}', space=vmem, size = 0x10000, scoped, tag = 'output window, operand 0']
    loop: start=0, step=1, limit=6
    $region2: #{spectral_filter_layer_forward.1} parent=1 // loop_pre_header
      _
    $region3: #{spectral_filter_layer_forward.1} parent=1 // loop_header
      %s8 = sphi 0, %s12
      %p9 = scmp.ge.s32.totalorder %s8, 6
      %s15 = sphi 0, %s27
      %s16 = sphi 0, %s23
      %s17 = sphi 0, %s15
      %s18 = sphi 0, %s16
      %s19 = sphi 0, %s17
      %s20 = sphi 0, %s18
      %s32 = sphi 0, %s34
      %s35 = sphi 0, %s32
      %s36 = sphi 0, %s35
      %s52 = sphi 0, %s36
      %s60 = sphi 0, %s62
      %s63 = sphi 0, %s60
      %s64 = sphi 0, %s63
      %s80 = sphi 0, %s64
      %s86 = sphi 0, %s88
      %s89 = sphi 0, %s86
      %s90 = sphi 0, %s89
      %s106 = sphi 0, %s90
    $region4: #{spectral_filter_layer_forward.1} parent=1 // loop_header_branch
      %11 = sbr.rel (%p9) target = $region8
    $region5: #{spectral_filter_layer_forward.1} parent=1 // loop_body
      %s13 = ssub.s32 %s8, 1
      %s14 = ssub.s32 %s8, 2
      %s21 = sadd.s32 1, %s16
      %p22 = scmp.ge.s32.totalorder %s21, 2
      %s23 = scalar_select %p22, 0, %s21
      %s24 = sadd.s32 1, %s15
      %s25 = scalar_select %p22, %s24, %s15
      %p26 = scmp.ge.s32.totalorder %s25, 2
      %s27 = scalar_select %p26, 0, %s25
      %s28 = ssub.s32 %s16, %s23
      %s29 = ssub.s32 %s15, %s27
      %s30 = sor.u32 %s28, %s29
      %p31 = scmp.eq.s32.totalorder %s30, 0
      %s33 = sadd.s32 %s32, 1
      %s34 = scalar_select %p31, %s32, %s33
      %p37 = pneg %p31
      %p38 = scmp.eq.s32.totalorder %s8, 3
      %p39 = por %p37, %p38
      %p40 = scmp.ne.s32.totalorder %s32, %s35
      %p41 = scmp.eq.s32.totalorder %s8, 0
      %p42 = por %p40, %p41
      %p43 = scmp.ne.s32.totalorder %s32, %s35
      %p44 = scmp.eq.s32.totalorder %s13, 3
      %p45 = por %p43, %p44
      %p46 = scmp.ne.s32.totalorder %s35, %s36
      %p47 = scmp.eq.s32.totalorder %s13, 0
      %p48 = por %p46, %p47
      %p49 = scmp.ne.s32.totalorder %s35, %s36
      %p50 = scmp.eq.s32.totalorder %s14, 3
      %p51 = por %p49, %p50
      %p53 = scmp.ne.s32.totalorder %s36, %s52
      %p54 = scmp.eq.s32.totalorder %s14, 0
      %p55 = por %p53, %p54
      %s56 = ssub.s32 %s16, %s23
      %s57 = ssub.s32 %s15, %s27
      %s58 = sor.u32 %s56, %s57
      %p59 = scmp.eq.s32.totalorder %s58, 0
      %s61 = sadd.s32 %s60, 1
      %s62 = scalar_select %p59, %s60, %s61
      %p65 = pneg %p59
      %p66 = scmp.eq.s32.totalorder %s8, 3
      %p67 = por %p65, %p66
      %p68 = scmp.ne.s32.totalorder %s60, %s63
      %p69 = scmp.eq.s32.totalorder %s8, 0
      %p70 = por %p68, %p69
      %p71 = scmp.ne.s32.totalorder %s60, %s63
      %p72 = scmp.eq.s32.totalorder %s13, 3
      %p73 = por %p71, %p72
      %p74 = scmp.ne.s32.totalorder %s63, %s64
      %p75 = scmp.eq.s32.totalorder %s13, 0
      %p76 = por %p74, %p75
      %p77 = scmp.ne.s32.totalorder %s63, %s64
      %p78 = scmp.eq.s32.totalorder %s14, 3
      %p79 = por %p77, %p78
      %p81 = scmp.ne.s32.totalorder %s64, %s80
      %p82 = scmp.eq.s32.totalorder %s14, 0
      %p83 = por %p81, %p82
      %s84 = ssub.s32 %s15, %s27
      %p85 = scmp.eq.s32.totalorder %s84, 0
      %s87 = sadd.s32 %s86, 1
      %s88 = scalar_select %p85, %s86, %s87
      %p91 = pneg %p85
      %p92 = scmp.eq.s32.totalorder %s8, 3
      %p93 = por %p91, %p92
      %p94 = scmp.ne.s32.totalorder %s86, %s89
      %p95 = scmp.eq.s32.totalorder %s8, 0
      %p96 = por %p94, %p95
      %p97 = scmp.ne.s32.totalorder %s86, %s89
      %p98 = scmp.eq.s32.totalorder %s13, 3
      %p99 = por %p97, %p98
      %p100 = scmp.ne.s32.totalorder %s89, %s90
      %p101 = scmp.eq.s32.totalorder %s13, 0
      %p102 = por %p100, %p101
      %p103 = scmp.ne.s32.totalorder %s89, %s90
      %p104 = scmp.eq.s32.totalorder %s14, 3
      %p105 = por %p103, %p104
      %p107 = scmp.ne.s32.totalorder %s90, %s106
      %p108 = scmp.eq.s32.totalorder %s14, 0
      %p109 = por %p107, %p108
      %p110 = scmp.le.s32.totalorder 1, %s8
      %p111 = scmp.lt.s32.totalorder %s8, 5
      %p112 = pnand %p110, %p111
      %p113 = pneg %p112
      // Predicated region
      $region9: #{spectral_filter_layer_forward.1} parent=5 // pred_check
        _
      $region10: #{spectral_filter_layer_forward.1} parent=5 // pred_check_branch
        %115 = sbr.rel (%p112) target = $region12
      $region11: #{spectral_filter_layer_forward.1} parent=5 // pred_region
        %s116 = ssub.s32 %s8, 1
      $region12: #{spectral_filter_layer_forward.1} parent=5 // pred_fallthru
        _
      %p117 = scmp.lt.s32.totalorder %s8, 4
      // Predicated region
      $region13: #{spectral_filter_layer_forward.1} parent=5 // pred_check
        %p118 = pneg %p117
      $region14: #{spectral_filter_layer_forward.1} parent=5 // pred_check_branch
        %120 = sbr.rel (%p118) target = $region16
      $region15: #{spectral_filter_layer_forward.1} parent=5 // pred_region
        // Predicated region
        $region17: #{spectral_filter_layer_forward.1} parent=15 // pred_check
          %p121 = pneg %p42
        $region18: #{spectral_filter_layer_forward.1} parent=15 // pred_check_branch
          %123 = sbr.rel (%p121) target = $region20
        $region19: #{spectral_filter_layer_forward.1} parent=15 // pred_region
          %s124 = sand.u32 %s32, 1
          %s125 = sand.u32 %s32, 1
          %s126 = smul.addr %s125, 32
          %s127 = scalar_lea.vmem [#allocation2], %s126
          %s128 = smul.addr %s16, 2
          %s129 = sadd.s32 %s15, %s128
          %s130 = smul.addr %s129, 8
          %s131 = scalar_lea.vmem %s0, %s130
          // Predicated region
          $region21: #{spectral_filter_layer_forward.1} parent=19 // pred_check
            _
          $region22: #{spectral_filter_layer_forward.1} parent=19 // pred_check_branch
            %133 = sbr.rel (0) target = $region24
          $region23: #{spectral_filter_layer_forward.1} parent=19 // pred_region
            // Predicated region
            $region25: #{spectral_filter_layer_forward.1} parent=23 // pred_check
              _
            $region26: #{spectral_filter_layer_forward.1} parent=23 // pred_check_branch
              %135 = sbr.rel (0) target = $region28
            $region27: #{spectral_filter_layer_forward.1} parent=23 // pred_region
              // Predicated region
              $region40: #{spectral_filter_layer_forward.1} parent=27 // pred_check
                _
              $region41: #{spectral_filter_layer_forward.1} parent=27 // pred_check_branch
                %156 = sbr.rel (0) target = $region43
              $region42: #{spectral_filter_layer_forward.1} parent=27 // pred_region
                loop: start=0, step=1, limit=1
                $region44: #{spectral_filter_layer_forward.1} parent=42 // loop_pre_header
                  _
                $region45: #{spectral_filter_layer_forward.1} parent=42 // loop_header
                  %s158 = sphi 0, %s162
                  %p159 = scmp.ge.s32.totalorder %s158, 1
                  %s163 = sphi %s131, %s131
                  %s164 = sphi %s127, %s127
                $region46: #{spectral_filter_layer_forward.1} parent=42 // loop_header_branch
                  %161 = sbr.rel (%p159) target = $region50
                $region47: #{spectral_filter_layer_forward.1} parent=42 // loop_body
                  %v165 = vld [vmem:[%s163] sm:$0xff]
                  %166 = vst [vmem:[%s164] sm:$0xff] %v165
                  %v167 = vld [vmem:[%s163 + $0x20] sm:$0xff]
                  %168 = vst [vmem:[%s164 + $0x8] sm:$0xff] %v167
                  %v169 = vld [vmem:[%s163 + $0x40] sm:$0xff]
                  %170 = vst [vmem:[%s164 + $0x10] sm:$0xff] %v169
                  %v171 = vld [vmem:[%s163 + $0x60] sm:$0xff]
                  %172 = vst [vmem:[%s164 + $0x18] sm:$0xff] %v171
                $region48: #{spectral_filter_layer_forward.1} parent=42 // loop_footer
                  %s162 = sadd.s32 1, %s158
                $region49: #{spectral_filter_layer_forward.1} parent=42 // loop_footer_branch
                  %157 = sbr.rel target = $region45
                $region50: #{spectral_filter_layer_forward.1} parent=42 // loop_exit
                  _
              $region43: #{spectral_filter_layer_forward.1} parent=27 // pred_fallthru
                _
              // Predicated region
              $region51: #{spectral_filter_layer_forward.1} parent=27 // pred_check
                _
              $region52: #{spectral_filter_layer_forward.1} parent=27 // pred_check_branch
                %174 = sbr.rel target = $region54
              $region53: #{spectral_filter_layer_forward.1} parent=27 // pred_region
                _
              $region54: #{spectral_filter_layer_forward.1} parent=27 // pred_fallthru
                _
            $region28: #{spectral_filter_layer_forward.1} parent=23 // pred_fallthru
              _
            // Predicated region
            $region29: #{spectral_filter_layer_forward.1} parent=23 // pred_check
              _
            $region30: #{spectral_filter_layer_forward.1} parent=23 // pred_check_branch
              %137 = sbr.rel target = $region32
            $region31: #{spectral_filter_layer_forward.1} parent=23 // pred_region
              loop: start=0, step=1, limit=1
              $region33: #{spectral_filter_layer_forward.1} parent=31 // loop_pre_header
                _
              $region34: #{spectral_filter_layer_forward.1} parent=31 // loop_header
                %s140 = sphi 0, %s144
                %p141 = scmp.ge.s32.totalorder %s140, 1
                %s145 = sphi %s131, %s131
                %s146 = sphi %s127, %s127
              $region35: #{spectral_filter_layer_forward.1} parent=31 // loop_header_branch
                %143 = sbr.rel (%p141) target = $region39
              $region36: #{spectral_filter_layer_forward.1} parent=31 // loop_body
                %v147 = vld [vmem:[%s145] sm:$0xff]
                %148 = vst [vmem:[%s146] sm:$0xff] %v147
                %v149 = vld [vmem:[%s145 + $0x20] sm:$0xff]
                %150 = vst [vmem:[%s146 + $0x8] sm:$0xff] %v149
                %v151 = vld [vmem:[%s145 + $0x40] sm:$0xff]
                %152 = vst [vmem:[%s146 + $0x10] sm:$0xff] %v151
                %v153 = vld [vmem:[%s145 + $0x60] sm:$0xff]
                %154 = vst [vmem:[%s146 + $0x18] sm:$0xff] %v153
              $region37: #{spectral_filter_layer_forward.1} parent=31 // loop_footer
                %s144 = sadd.s32 1, %s140
              $region38: #{spectral_filter_layer_forward.1} parent=31 // loop_footer_branch
                %139 = sbr.rel target = $region34
              $region39: #{spectral_filter_layer_forward.1} parent=31 // loop_exit
                _
            $region32: #{spectral_filter_layer_forward.1} parent=23 // pred_fallthru
              _
          $region24: #{spectral_filter_layer_forward.1} parent=19 // pred_fallthru
            _
          %175 = vnop
        $region20: #{spectral_filter_layer_forward.1} parent=15 // pred_fallthru
          _
        // Predicated region
        $region55: #{spectral_filter_layer_forward.1} parent=15 // pred_check
          %p176 = pneg %p70
        $region56: #{spectral_filter_layer_forward.1} parent=15 // pred_check_branch
          %178 = sbr.rel (%p176) target = $region58
        $region57: #{spectral_filter_layer_forward.1} parent=15 // pred_region
          %s179 = sand.u32 %s60, 1
          %s180 = sand.u32 %s60, 1
          %s181 = smul.addr %s180, 256
          %s182 = scalar_lea.vmem [#allocation3], %s181
          %s183 = smul.u32 8, %s16
          %s184 = smul.addr %s183, 4
          %s185 = sadd.s32 %s15, %s184
          %s186 = smul.addr %s185, 8
          %s187 = scalar_lea.vmem %s1, %s186
          // Predicated region
          $region59: #{spectral_filter_layer_forward.1} parent=57 // pred_check
            _
          $region60: #{spectral_filter_layer_forward.1} parent=57 // pred_check_branch
            %189 = sbr.rel (0) target = $region62
          $region61: #{spectral_filter_layer_forward.1} parent=57 // pred_region
            // Predicated region
            $region63: #{spectral_filter_layer_forward.1} parent=61 // pred_check
              _
            $region64: #{spectral_filter_layer_forward.1} parent=61 // pred_check_branch
              %191 = sbr.rel (0) target = $region66
            $region65: #{spectral_filter_layer_forward.1} parent=61 // pred_region
              // Predicated region
              $region78: #{spectral_filter_layer_forward.1} parent=65 // pred_check
                _
              $region79: #{spectral_filter_layer_forward.1} parent=65 // pred_check_branch
                %268 = sbr.rel (0) target = $region81
              $region80: #{spectral_filter_layer_forward.1} parent=65 // pred_region
                loop: start=0, step=1, limit=1
                $region82: #{spectral_filter_layer_forward.1} parent=80 // loop_pre_header
                  _
                $region83: #{spectral_filter_layer_forward.1} parent=80 // loop_header
                  %s270 = sphi 0, %s274
                  %p271 = scmp.ge.s32.totalorder %s270, 1
                  %s275 = sphi %s187, %s187
                  %s276 = sphi %s182, %s182
                $region84: #{spectral_filter_layer_forward.1} parent=80 // loop_header_branch
                  %273 = sbr.rel (%p271) target = $region88
                $region85: #{spectral_filter_layer_forward.1} parent=80 // loop_body
                  %v277 = vld [vmem:[%s275] sm:$0xff]
                  %278 = vst [vmem:[%s276] sm:$0xff] %v277
                  %v279 = vld [vmem:[%s275 + $0x10] sm:$0xff]
                  %280 = vst [vmem:[%s276 + $0x8] sm:$0xff] %v279
                  %v281 = vld [vmem:[%s275 + $0x20] sm:$0xff]
                  %282 = vst [vmem:[%s276 + $0x10] sm:$0xff] %v281
                  %v283 = vld [vmem:[%s275 + $0x30] sm:$0xff]
                  %284 = vst [vmem:[%s276 + $0x18] sm:$0xff] %v283
                  %v285 = vld [vmem:[%s275 + $0x40] sm:$0xff]
                  %286 = vst [vmem:[%s276 + $0x20] sm:$0xff] %v285
                  %v287 = vld [vmem:[%s275 + $0x50] sm:$0xff]
                  %288 = vst [vmem:[%s276 + $0x28] sm:$0xff] %v287
                  %v289 = vld [vmem:[%s275 + $0x60] sm:$0xff]
                  %290 = vst [vmem:[%s276 + $0x30] sm:$0xff] %v289
                  %v291 = vld [vmem:[%s275 + $0x70] sm:$0xff]
                  %292 = vst [vmem:[%s276 + $0x38] sm:$0xff] %v291
                  %v293 = vld [vmem:[%s275 + $0x80] sm:$0xff]
                  %294 = vst [vmem:[%s276 + $0x40] sm:$0xff] %v293
                  %v295 = vld [vmem:[%s275 + $0x90] sm:$0xff]
                  %296 = vst [vmem:[%s276 + $0x48] sm:$0xff] %v295
                  %v297 = vld [vmem:[%s275 + $0xa0] sm:$0xff]
                  %298 = vst [vmem:[%s276 + $0x50] sm:$0xff] %v297
                  %v299 = vld [vmem:[%s275 + $0xb0] sm:$0xff]
                  %300 = vst [vmem:[%s276 + $0x58] sm:$0xff] %v299
                  %v301 = vld [vmem:[%s275 + $0xc0] sm:$0xff]
                  %302 = vst [vmem:[%s276 + $0x60] sm:$0xff] %v301
                  %v303 = vld [vmem:[%s275 + $0xd0] sm:$0xff]
                  %304 = vst [vmem:[%s276 + $0x68] sm:$0xff] %v303
                  %v305 = vld [vmem:[%s275 + $0xe0] sm:$0xff]
                  %306 = vst [vmem:[%s276 + $0x70] sm:$0xff] %v305
                  %v307 = vld [vmem:[%s275 + $0xf0] sm:$0xff]
                  %308 = vst [vmem:[%s276 + $0x78] sm:$0xff] %v307
                  %v309 = vld [vmem:[%s275 + $0x200] sm:$0xff]
                  %310 = vst [vmem:[%s276 + $0x80] sm:$0xff] %v309
                  %v311 = vld [vmem:[%s275 + $0x210] sm:$0xff]
                  %312 = vst [vmem:[%s276 + $0x88] sm:$0xff] %v311
                  %v313 = vld [vmem:[%s275 + $0x220] sm:$0xff]
                  %314 = vst [vmem:[%s276 + $0x90] sm:$0xff] %v313
                  %v315 = vld [vmem:[%s275 + $0x230] sm:$0xff]
                  %316 = vst [vmem:[%s276 + $0x98] sm:$0xff] %v315
                  %v317 = vld [vmem:[%s275 + $0x240] sm:$0xff]
                  %318 = vst [vmem:[%s276 + $0xa0] sm:$0xff] %v317
                  %v319 = vld [vmem:[%s275 + $0x250] sm:$0xff]
                  %320 = vst [vmem:[%s276 + $0xa8] sm:$0xff] %v319
                  %v321 = vld [vmem:[%s275 + $0x260] sm:$0xff]
                  %322 = vst [vmem:[%s276 + $0xb0] sm:$0xff] %v321
                  %v323 = vld [vmem:[%s275 + $0x270] sm:$0xff]
                  %324 = vst [vmem:[%s276 + $0xb8] sm:$0xff] %v323
                  %v325 = vld [vmem:[%s275 + $0x280] sm:$0xff]
                  %326 = vst [vmem:[%s276 + $0xc0] sm:$0xff] %v325
                  %v327 = vld [vmem:[%s275 + $0x290] sm:$0xff]
                  %328 = vst [vmem:[%s276 + $0xc8] sm:$0xff] %v327
                  %v329 = vld [vmem:[%s275 + $0x2a0] sm:$0xff]
                  %330 = vst [vmem:[%s276 + $0xd0] sm:$0xff] %v329
                  %v331 = vld [vmem:[%s275 + $0x2b0] sm:$0xff]
                  %332 = vst [vmem:[%s276 + $0xd8] sm:$0xff] %v331
                  %v333 = vld [vmem:[%s275 + $0x2c0] sm:$0xff]
                  %334 = vst [vmem:[%s276 + $0xe0] sm:$0xff] %v333
                  %v335 = vld [vmem:[%s275 + $0x2d0] sm:$0xff]
                  %336 = vst [vmem:[%s276 + $0xe8] sm:$0xff] %v335
                  %v337 = vld [vmem:[%s275 + $0x2e0] sm:$0xff]
                  %338 = vst [vmem:[%s276 + $0xf0] sm:$0xff] %v337
                  %v339 = vld [vmem:[%s275 + $0x2f0] sm:$0xff]
                  %340 = vst [vmem:[%s276 + $0xf8] sm:$0xff] %v339
                $region86: #{spectral_filter_layer_forward.1} parent=80 // loop_footer
                  %s274 = sadd.s32 1, %s270
                $region87: #{spectral_filter_layer_forward.1} parent=80 // loop_footer_branch
                  %269 = sbr.rel target = $region83
                $region88: #{spectral_filter_layer_forward.1} parent=80 // loop_exit
                  _
              $region81: #{spectral_filter_layer_forward.1} parent=65 // pred_fallthru
                _
              // Predicated region
              $region89: #{spectral_filter_layer_forward.1} parent=65 // pred_check
                _
              $region90: #{spectral_filter_layer_forward.1} parent=65 // pred_check_branch
                %342 = sbr.rel target = $region92
              $region91: #{spectral_filter_layer_forward.1} parent=65 // pred_region
                _
              $region92: #{spectral_filter_layer_forward.1} parent=65 // pred_fallthru
                _
            $region66: #{spectral_filter_layer_forward.1} parent=61 // pred_fallthru
              _
            // Predicated region
            $region67: #{spectral_filter_layer_forward.1} parent=61 // pred_check
              _
            $region68: #{spectral_filter_layer_forward.1} parent=61 // pred_check_branch
              %193 = sbr.rel target = $region70
            $region69: #{spectral_filter_layer_forward.1} parent=61 // pred_region
              loop: start=0, step=1, limit=1
              $region71: #{spectral_filter_layer_forward.1} parent=69 // loop_pre_header
                _
              $region72: #{spectral_filter_layer_forward.1} parent=69 // loop_header
                %s196 = sphi 0, %s200
                %p197 = scmp.ge.s32.totalorder %s196, 1
                %s201 = sphi %s187, %s187
                %s202 = sphi %s182, %s182
              $region73: #{spectral_filter_layer_forward.1} parent=69 // loop_header_branch
                %199 = sbr.rel (%p197) target = $region77
              $region74: #{spectral_filter_layer_forward.1} parent=69 // loop_body
                %v203 = vld [vmem:[%s201] sm:$0xff]
                %204 = vst [vmem:[%s202] sm:$0xff] %v203
                %v205 = vld [vmem:[%s201 + $0x10] sm:$0xff]
                %206 = vst [vmem:[%s202 + $0x8] sm:$0xff] %v205
                %v207 = vld [vmem:[%s201 + $0x20] sm:$0xff]
                %208 = vst [vmem:[%s202 + $0x10] sm:$0xff] %v207
                %v209 = vld [vmem:[%s201 + $0x30] sm:$0xff]
                %210 = vst [vmem:[%s202 + $0x18] sm:$0xff] %v209
                %v211 = vld [vmem:[%s201 + $0x40] sm:$0xff]
                %212 = vst [vmem:[%s202 + $0x20] sm:$0xff] %v211
                %v213 = vld [vmem:[%s201 + $0x50] sm:$0xff]
                %214 = vst [vmem:[%s202 + $0x28] sm:$0xff] %v213
                %v215 = vld [vmem:[%s201 + $0x60] sm:$0xff]
                %216 = vst [vmem:[%s202 + $0x30] sm:$0xff] %v215
                %v217 = vld [vmem:[%s201 + $0x70] sm:$0xff]
                %218 = vst [vmem:[%s202 + $0x38] sm:$0xff] %v217
                %v219 = vld [vmem:[%s201 + $0x80] sm:$0xff]
                %220 = vst [vmem:[%s202 + $0x40] sm:$0xff] %v219
                %v221 = vld [vmem:[%s201 + $0x90] sm:$0xff]
                %222 = vst [vmem:[%s202 + $0x48] sm:$0xff] %v221
                %v223 = vld [vmem:[%s201 + $0xa0] sm:$0xff]
                %224 = vst [vmem:[%s202 + $0x50] sm:$0xff] %v223
                %v225 = vld [vmem:[%s201 + $0xb0] sm:$0xff]
                %226 = vst [vmem:[%s202 + $0x58] sm:$0xff] %v225
                %v227 = vld [vmem:[%s201 + $0xc0] sm:$0xff]
                %228 = vst [vmem:[%s202 + $0x60] sm:$0xff] %v227
                %v229 = vld [vmem:[%s201 + $0xd0] sm:$0xff]
                %230 = vst [vmem:[%s202 + $0x68] sm:$0xff] %v229
                %v231 = vld [vmem:[%s201 + $0xe0] sm:$0xff]
                %232 = vst [vmem:[%s202 + $0x70] sm:$0xff] %v231
                %v233 = vld [vmem:[%s201 + $0xf0] sm:$0xff]
                %234 = vst [vmem:[%s202 + $0x78] sm:$0xff] %v233
                %v235 = vld [vmem:[%s201 + $0x200] sm:$0xff]
                %236 = vst [vmem:[%s202 + $0x80] sm:$0xff] %v235
                %v237 = vld [vmem:[%s201 + $0x210] sm:$0xff]
                %238 = vst [vmem:[%s202 + $0x88] sm:$0xff] %v237
                %v239 = vld [vmem:[%s201 + $0x220] sm:$0xff]
                %240 = vst [vmem:[%s202 + $0x90] sm:$0xff] %v239
                %v241 = vld [vmem:[%s201 + $0x230] sm:$0xff]
                %242 = vst [vmem:[%s202 + $0x98] sm:$0xff] %v241
                %v243 = vld [vmem:[%s201 + $0x240] sm:$0xff]
                %244 = vst [vmem:[%s202 + $0xa0] sm:$0xff] %v243
                %v245 = vld [vmem:[%s201 + $0x250] sm:$0xff]
                %246 = vst [vmem:[%s202 + $0xa8] sm:$0xff] %v245
                %v247 = vld [vmem:[%s201 + $0x260] sm:$0xff]
                %248 = vst [vmem:[%s202 + $0xb0] sm:$0xff] %v247
                %v249 = vld [vmem:[%s201 + $0x270] sm:$0xff]
                %250 = vst [vmem:[%s202 + $0xb8] sm:$0xff] %v249
                %v251 = vld [vmem:[%s201 + $0x280] sm:$0xff]
                %252 = vst [vmem:[%s202 + $0xc0] sm:$0xff] %v251
                %v253 = vld [vmem:[%s201 + $0x290] sm:$0xff]
                %254 = vst [vmem:[%s202 + $0xc8] sm:$0xff] %v253
                %v255 = vld [vmem:[%s201 + $0x2a0] sm:$0xff]
                %256 = vst [vmem:[%s202 + $0xd0] sm:$0xff] %v255
                %v257 = vld [vmem:[%s201 + $0x2b0] sm:$0xff]
                %258 = vst [vmem:[%s202 + $0xd8] sm:$0xff] %v257
                %v259 = vld [vmem:[%s201 + $0x2c0] sm:$0xff]
                %260 = vst [vmem:[%s202 + $0xe0] sm:$0xff] %v259
                %v261 = vld [vmem:[%s201 + $0x2d0] sm:$0xff]
                %262 = vst [vmem:[%s202 + $0xe8] sm:$0xff] %v261
                %v263 = vld [vmem:[%s201 + $0x2e0] sm:$0xff]
                %264 = vst [vmem:[%s202 + $0xf0] sm:$0xff] %v263
                %v265 = vld [vmem:[%s201 + $0x2f0] sm:$0xff]
                %266 = vst [vmem:[%s202 + $0xf8] sm:$0xff] %v265
              $region75: #{spectral_filter_layer_forward.1} parent=69 // loop_footer
                %s200 = sadd.s32 1, %s196
              $region76: #{spectral_filter_layer_forward.1} parent=69 // loop_footer_branch
                %195 = sbr.rel target = $region72
              $region77: #{spectral_filter_layer_forward.1} parent=69 // loop_exit
                _
            $region70: #{spectral_filter_layer_forward.1} parent=61 // pred_fallthru
              _
          $region62: #{spectral_filter_layer_forward.1} parent=57 // pred_fallthru
            _
          %343 = vnop
        $region58: #{spectral_filter_layer_forward.1} parent=15 // pred_fallthru
          _
      $region16: #{spectral_filter_layer_forward.1} parent=5 // pred_fallthru
        _
      %p344 = scmp.le.s32.totalorder 1, %s8
      %p345 = scmp.lt.s32.totalorder %s8, 5
      %p346 = pnand %p344, %p345
      %p347 = pneg %p346
      // Predicated region
      $region93: #{spectral_filter_layer_forward.1} parent=5 // pred_check
        _
      $region94: #{spectral_filter_layer_forward.1} parent=5 // pred_check_branch
        %349 = sbr.rel (%p346) target = $region96
      $region95: #{spectral_filter_layer_forward.1} parent=5 // pred_region
        %s350 = ssub.s32 %s8, 1
        %s351 = sand.u32 %s35, 1
        %s352 = sand.u32 %s35, 1
        %s353 = smul.addr %s352, 32
        %s354 = scalar_lea.vmem [#allocation2], %s353
        // Predicated region
        $region97: #{spectral_filter_layer_forward.1} parent=95 // pred_check
          %p355 = pneg %p48
        $region98: #{spectral_filter_layer_forward.1} parent=95 // pred_check_branch
          %357 = sbr.rel (%p355) target = $region100
        $region99: #{spectral_filter_layer_forward.1} parent=95 // pred_region
          _
        $region100: #{spectral_filter_layer_forward.1} parent=95 // pred_fallthru
          _
        %s358 = sand.u32 %s63, 1
        %s359 = sand.u32 %s63, 1
        %s360 = smul.addr %s359, 256
        %s361 = scalar_lea.vmem [#allocation3], %s360
        // Predicated region
        $region101: #{spectral_filter_layer_forward.1} parent=95 // pred_check
          %p362 = pneg %p76
        $region102: #{spectral_filter_layer_forward.1} parent=95 // pred_check_branch
          %364 = sbr.rel (%p362) target = $region104
        $region103: #{spectral_filter_layer_forward.1} parent=95 // pred_region
          _
        $region104: #{spectral_filter_layer_forward.1} parent=95 // pred_fallthru
          _
        %s365 = sand.u32 %s35, 1
        %s366 = sand.u32 %s35, 1
        %s367 = smul.addr %s366, 32
        %s368 = scalar_lea.vmem [#allocation2], %s367
        %p369 = pneg %p48
        %p370 = pneg %p45
        %s371 = sand.u32 %s63, 1
        %s372 = sand.u32 %s63, 1
        %s373 = smul.addr %s372, 256
        %s374 = scalar_lea.vmem [#allocation3], %s373
        %p375 = pneg %p76
        %p376 = pneg %p73
        %p377 = pneg %p102
        %p378 = pneg %p99
        %s379 = sand.u32 %s89, 1
        %s380 = sand.u32 %s89, 1
        %s381 = smul.addr %s380, 64
        %s382 = scalar_lea.vmem [#allocation4], %s381
        %s383 = smul.u32 8, %s18
        %v384 = vld [vmem:[%s354] sm:$0x1]
        %v385 = vld [vmem:[%s354 + $0x8] sm:$0x1]
        %s386 = scalar_lea.vmem %s354, 16 [#allocation2]
        %v387 = vld [vmem:[%s386] sm:$0x1]
        %v388 = vld [vmem:[%s386 + $0x8] sm:$0x1]
        %v389 = vld [vmem:[%s361] sm:$0xff]
        %v390 = vld [vmem:[%s361 + $0x8] sm:$0xff]
        %s391 = scalar_lea.vmem %s361, 128 [#allocation3]
        %v392 = vld [vmem:[%s391] sm:$0xff]
        %v393 = vld [vmem:[%s391 + $0x8] sm:$0xff]
        %v394 = vlaneseq
        %v395 = vshrl.u32 %v394, 7
        %v396 = vsub.s32 0, %v395
        %v397 = vrot.slane %v384, %v396
        %v398 = vlaneseq
        %v399 = vshrl.u32 %v398, 7
        %v400 = vsub.s32 0, %v399
        %v401 = vrot.slane %v385, %v400
        %v402 = vmul.f32 %v397, %v389
        %v403 = vmul.f32 %v397, %v390
        %v404 = vmul.f32 %v401, %v389
        %v405 = vmul.f32 %v401, %v390
        %v406 = vlaneseq
        %v407 = vshrl.u32 %v406, 7
        %v408 = vsub.s32 0, %v407
        %v409 = vrot.slane %v387, %v408
        %v410 = vlaneseq
        %v411 = vshrl.u32 %v410, 7
        %v412 = vsub.s32 0, %v411
        %v413 = vrot.slane %v388, %v412
        %v414 = vmul.f32 %v409, %v392
        %v415 = vmul.f32 %v409, %v393
        %v416 = vmul.f32 %v413, %v392
        %v417 = vmul.f32 %v413, %v393
        %v418 = vsub.f32 %v402, %v414
        %v419 = vsub.f32 %v403, %v415
        %v420 = vsub.f32 %v404, %v416
        %v421 = vsub.f32 %v405, %v417
        %v422 = vmul.f32 %v397, %v392
        %v423 = vmul.f32 %v397, %v393
        %v424 = vmul.f32 %v401, %v392
        %v425 = vmul.f32 %v401, %v393
        %v426 = vmul.f32 %v409, %v389
        %v427 = vmul.f32 %v409, %v390
        %v428 = vmul.f32 %v413, %v389
        %v429 = vmul.f32 %v413, %v390
        %v430 = vadd.f32 %v422, %v426
        %v431 = vadd.f32 %v423, %v427
        %v432 = vadd.f32 %v424, %v428
        %v433 = vadd.f32 %v425, %v429
        %v434 = vld [vmem:[%s354 + $0x1] sm:$0x1]
        %v435 = vld [vmem:[%s354 + $0x9] sm:$0x1]
        %v436 = vld [vmem:[%s386 + $0x1] sm:$0x1]
        %v437 = vld [vmem:[%s386 + $0x9] sm:$0x1]
        %s438 = scalar_lea.vmem %s361, 16 [#allocation3]
        %v439 = vld [vmem:[%s438] sm:$0xff]
        %v440 = vld [vmem:[%s438 + $0x8] sm:$0xff]
        %s441 = scalar_lea.vmem %s361, 144 [#allocation3]
        %v442 = vld [vmem:[%s441] sm:$0xff]
        %v443 = vld [vmem:[%s441 + $0x8] sm:$0xff]
        %v444 = vlaneseq
        %v445 = vshrl.u32 %v444, 7
        %v446 = vsub.s32 0, %v445
        %v447 = vrot.slane %v434, %v446
        %v448 = vlaneseq
        %v449 = vshrl.u32 %v448, 7
        %v450 = vsub.s32 0, %v449
        %v451 = vrot.slane %v435, %v450
        %v452 = vmul.f32 %v447, %v439
        %v453 = vmul.f32 %v447, %v440
        %v454 = vmul.f32 %v451, %v439
        %v455 = vmul.f32 %v451, %v440
        %v456 = vlaneseq
        %v457 = vshrl.u32 %v456, 7
        %v458 = vsub.s32 0, %v457
        %v459 = vrot.slane %v436, %v458
        %v460 = vlaneseq
        %v461 = vshrl.u32 %v460, 7
        %v462 = vsub.s32 0, %v461
        %v463 = vrot.slane %v437, %v462
        %v464 = vmul.f32 %v459, %v442
        %v465 = vmul.f32 %v459, %v443
        %v466 = vmul.f32 %v463, %v442
        %v467 = vmul.f32 %v463, %v443
        %v468 = vsub.f32 %v452, %v464
        %v469 = vsub.f32 %v453, %v465
        %v470 = vsub.f32 %v454, %v466
        %v471 = vsub.f32 %v455, %v467
        %v472 = vmul.f32 %v447, %v442
        %v473 = vmul.f32 %v447, %v443
        %v474 = vmul.f32 %v451, %v442
        %v475 = vmul.f32 %v451, %v443
        %v476 = vmul.f32 %v459, %v439
        %v477 = vmul.f32 %v459, %v440
        %v478 = vmul.f32 %v463, %v439
        %v479 = vmul.f32 %v463, %v440
        %v480 = vadd.f32 %v472, %v476
        %v481 = vadd.f32 %v473, %v477
        %v482 = vadd.f32 %v474, %v478
        %v483 = vadd.f32 %v475, %v479
        %v484 = vadd.f32 %v418, %v468
        %v485 = vadd.f32 %v419, %v469
        %v486 = vadd.f32 %v420, %v470
        %v487 = vadd.f32 %v421, %v471
        %v488 = vadd.f32 %v430, %v480
        %v489 = vadd.f32 %v431, %v481
        %v490 = vadd.f32 %v432, %v482
        %v491 = vadd.f32 %v433, %v483
        %v492 = vld [vmem:[%s354 + $0x2] sm:$0x1]
        %v493 = vld [vmem:[%s354 + $0xa] sm:$0x1]
        %v494 = vld [vmem:[%s386 + $0x2] sm:$0x1]
        %v495 = vld [vmem:[%s386 + $0xa] sm:$0x1]
        %s496 = scalar_lea.vmem %s361, 32 [#allocation3]
        %v497 = vld [vmem:[%s496] sm:$0xff]
        %v498 = vld [vmem:[%s496 + $0x8] sm:$0xff]
        %s499 = scalar_lea.vmem %s361, 160 [#allocation3]
        %v500 = vld [vmem:[%s499] sm:$0xff]
        %v501 = vld [vmem:[%s499 + $0x8] sm:$0xff]
        %v502 = vlaneseq
        %v503 = vshrl.u32 %v502, 7
        %v504 = vsub.s32 0, %v503
        %v505 = vrot.slane %v492, %v504
        %v506 = vlaneseq
        %v507 = vshrl.u32 %v506, 7
        %v508 = vsub.s32 0, %v507
        %v509 = vrot.slane %v493, %v508
        %v510 = vmul.f32 %v505, %v497
        %v511 = vmul.f32 %v505, %v498
        %v512 = vmul.f32 %v509, %v497
        %v513 = vmul.f32 %v509, %v498
        %v514 = vlaneseq
        %v515 = vshrl.u32 %v514, 7
        %v516 = vsub.s32 0, %v515
        %v517 = vrot.slane %v494, %v516
        %v518 = vlaneseq
        %v519 = vshrl.u32 %v518, 7
        %v520 = vsub.s32 0, %v519
        %v521 = vrot.slane %v495, %v520
        %v522 = vmul.f32 %v517, %v500
        %v523 = vmul.f32 %v517, %v501
        %v524 = vmul.f32 %v521, %v500
        %v525 = vmul.f32 %v521, %v501
        %v526 = vsub.f32 %v510, %v522
        %v527 = vsub.f32 %v511, %v523
        %v528 = vsub.f32 %v512, %v524
        %v529 = vsub.f32 %v513, %v525
        %v530 = vmul.f32 %v505, %v500
        %v531 = vmul.f32 %v505, %v501
        %v532 = vmul.f32 %v509, %v500
        %v533 = vmul.f32 %v509, %v501
        %v534 = vmul.f32 %v517, %v497
        %v535 = vmul.f32 %v517, %v498
        %v536 = vmul.f32 %v521, %v497
        %v537 = vmul.f32 %v521, %v498
        %v538 = vadd.f32 %v530, %v534
        %v539 = vadd.f32 %v531, %v535
        %v540 = vadd.f32 %v532, %v536
        %v541 = vadd.f32 %v533, %v537
        %v542 = vadd.f32 %v484, %v526
        %v543 = vadd.f32 %v485, %v527
        %v544 = vadd.f32 %v486, %v528
        %v545 = vadd.f32 %v487, %v529
        %v546 = vadd.f32 %v488, %v538
        %v547 = vadd.f32 %v489, %v539
        %v548 = vadd.f32 %v490, %v540
        %v549 = vadd.f32 %v491, %v541
        %v550 = vld [vmem:[%s354 + $0x3] sm:$0x1]
        %v551 = vld [vmem:[%s354 + $0xb] sm:$0x1]
        %v552 = vld [vmem:[%s386 + $0x3] sm:$0x1]
        %v553 = vld [vmem:[%s386 + $0xb] sm:$0x1]
        %s554 = scalar_lea.vmem %s361, 48 [#allocation3]
        %v555 = vld [vmem:[%s554] sm:$0xff]
        %v556 = vld [vmem:[%s554 + $0x8] sm:$0xff]
        %s557 = scalar_lea.vmem %s361, 176 [#allocation3]
        %v558 = vld [vmem:[%s557] sm:$0xff]
        %v559 = vld [vmem:[%s557 + $0x8] sm:$0xff]
        %v560 = vlaneseq
        %v561 = vshrl.u32 %v560, 7
        %v562 = vsub.s32 0, %v561
        %v563 = vrot.slane %v550, %v562
        %v564 = vlaneseq
        %v565 = vshrl.u32 %v564, 7
        %v566 = vsub.s32 0, %v565
        %v567 = vrot.slane %v551, %v566
        %v568 = vmul.f32 %v563, %v555
        %v569 = vmul.f32 %v563, %v556
        %v570 = vmul.f32 %v567, %v555
        %v571 = vmul.f32 %v567, %v556
        %v572 = vlaneseq
        %v573 = vshrl.u32 %v572, 7
        %v574 = vsub.s32 0, %v573
        %v575 = vrot.slane %v552, %v574
        %v576 = vlaneseq
        %v577 = vshrl.u32 %v576, 7
        %v578 = vsub.s32 0, %v577
        %v579 = vrot.slane %v553, %v578
        %v580 = vmul.f32 %v575, %v558
        %v581 = vmul.f32 %v575, %v559
        %v582 = vmul.f32 %v579, %v558
        %v583 = vmul.f32 %v579, %v559
        %v584 = vsub.f32 %v568, %v580
        %v585 = vsub.f32 %v569, %v581
        %v586 = vsub.f32 %v570, %v582
        %v587 = vsub.f32 %v571, %v583
        %v588 = vmul.f32 %v563, %v558
        %v589 = vmul.f32 %v563, %v559
        %v590 = vmul.f32 %v567, %v558
        %v591 = vmul.f32 %v567, %v559
        %v592 = vmul.f32 %v575, %v555
        %v593 = vmul.f32 %v575, %v556
        %v594 = vmul.f32 %v579, %v555
        %v595 = vmul.f32 %v579, %v556
        %v596 = vadd.f32 %v588, %v592
        %v597 = vadd.f32 %v589, %v593
        %v598 = vadd.f32 %v590, %v594
        %v599 = vadd.f32 %v591, %v595
        %v600 = vadd.f32 %v542, %v584
        %v601 = vadd.f32 %v543, %v585
        %v602 = vadd.f32 %v544, %v586
        %v603 = vadd.f32 %v545, %v587
        %v604 = vadd.f32 %v546, %v596
        %v605 = vadd.f32 %v547, %v597
        %v606 = vadd.f32 %v548, %v598
        %v607 = vadd.f32 %v549, %v599
        %v608 = vld [vmem:[%s354 + $0x4] sm:$0x1]
        %v609 = vld [vmem:[%s354 + $0xc] sm:$0x1]
        %v610 = vld [vmem:[%s386 + $0x4] sm:$0x1]
        %v611 = vld [vmem:[%s386 + $0xc] sm:$0x1]
        %s612 = scalar_lea.vmem %s361, 64 [#allocation3]
        %v613 = vld [vmem:[%s612] sm:$0xff]
        %v614 = vld [vmem:[%s612 + $0x8] sm:$0xff]
        %s615 = scalar_lea.vmem %s361, 192 [#allocation3]
        %v616 = vld [vmem:[%s615] sm:$0xff]
        %v617 = vld [vmem:[%s615 + $0x8] sm:$0xff]
        %v618 = vlaneseq
        %v619 = vshrl.u32 %v618, 7
        %v620 = vsub.s32 0, %v619
        %v621 = vrot.slane %v608, %v620
        %v622 = vlaneseq
        %v623 = vshrl.u32 %v622, 7
        %v624 = vsub.s32 0, %v623
        %v625 = vrot.slane %v609, %v624
        %v626 = vmul.f32 %v621, %v613
        %v627 = vmul.f32 %v621, %v614
        %v628 = vmul.f32 %v625, %v613
        %v629 = vmul.f32 %v625, %v614
        %v630 = vlaneseq
        %v631 = vshrl.u32 %v630, 7
        %v632 = vsub.s32 0, %v631
        %v633 = vrot.slane %v610, %v632
        %v634 = vlaneseq
        %v635 = vshrl.u32 %v634, 7
        %v636 = vsub.s32 0, %v635
        %v637 = vrot.slane %v611, %v636
        %v638 = vmul.f32 %v633, %v616
        %v639 = vmul.f32 %v633, %v617
        %v640 = vmul.f32 %v637, %v616
        %v641 = vmul.f32 %v637, %v617
        %v642 = vsub.f32 %v626, %v638
        %v643 = vsub.f32 %v627, %v639
        %v644 = vsub.f32 %v628, %v640
        %v645 = vsub.f32 %v629, %v641
        %v646 = vmul.f32 %v621, %v616
        %v647 = vmul.f32 %v621, %v617
        %v648 = vmul.f32 %v625, %v616
        %v649 = vmul.f32 %v625, %v617
        %v650 = vmul.f32 %v633, %v613
        %v651 = vmul.f32 %v633, %v614
        %v652 = vmul.f32 %v637, %v613
        %v653 = vmul.f32 %v637, %v614
        %v654 = vadd.f32 %v646, %v650
        %v655 = vadd.f32 %v647, %v651
        %v656 = vadd.f32 %v648, %v652
        %v657 = vadd.f32 %v649, %v653
        %v658 = vadd.f32 %v600, %v642
        %v659 = vadd.f32 %v601, %v643
        %v660 = vadd.f32 %v602, %v644
        %v661 = vadd.f32 %v603, %v645
        %v662 = vadd.f32 %v604, %v654
        %v663 = vadd.f32 %v605, %v655
        %v664 = vadd.f32 %v606, %v656
        %v665 = vadd.f32 %v607, %v657
        %v666 = vld [vmem:[%s354 + $0x5] sm:$0x1]
        %v667 = vld [vmem:[%s354 + $0xd] sm:$0x1]
        %v668 = vld [vmem:[%s386 + $0x5] sm:$0x1]
        %v669 = vld [vmem:[%s386 + $0xd] sm:$0x1]
        %s670 = scalar_lea.vmem %s361, 80 [#allocation3]
        %v671 = vld [vmem:[%s670] sm:$0xff]
        %v672 = vld [vmem:[%s670 + $0x8] sm:$0xff]
        %s673 = scalar_lea.vmem %s361, 208 [#allocation3]
        %v674 = vld [vmem:[%s673] sm:$0xff]
        %v675 = vld [vmem:[%s673 + $0x8] sm:$0xff]
        %v676 = vlaneseq
        %v677 = vshrl.u32 %v676, 7
        %v678 = vsub.s32 0, %v677
        %v679 = vrot.slane %v666, %v678
        %v680 = vlaneseq
        %v681 = vshrl.u32 %v680, 7
        %v682 = vsub.s32 0, %v681
        %v683 = vrot.slane %v667, %v682
        %v684 = vmul.f32 %v679, %v671
        %v685 = vmul.f32 %v679, %v672
        %v686 = vmul.f32 %v683, %v671
        %v687 = vmul.f32 %v683, %v672
        %v688 = vlaneseq
        %v689 = vshrl.u32 %v688, 7
        %v690 = vsub.s32 0, %v689
        %v691 = vrot.slane %v668, %v690
        %v692 = vlaneseq
        %v693 = vshrl.u32 %v692, 7
        %v694 = vsub.s32 0, %v693
        %v695 = vrot.slane %v669, %v694
        %v696 = vmul.f32 %v691, %v674
        %v697 = vmul.f32 %v691, %v675
        %v698 = vmul.f32 %v695, %v674
        %v699 = vmul.f32 %v695, %v675
        %v700 = vsub.f32 %v684, %v696
        %v701 = vsub.f32 %v685, %v697
        %v702 = vsub.f32 %v686, %v698
        %v703 = vsub.f32 %v687, %v699
        %v704 = vmul.f32 %v679, %v674
        %v705 = vmul.f32 %v679, %v675
        %v706 = vmul.f32 %v683, %v674
        %v707 = vmul.f32 %v683, %v675
        %v708 = vmul.f32 %v691, %v671
        %v709 = vmul.f32 %v691, %v672
        %v710 = vmul.f32 %v695, %v671
        %v711 = vmul.f32 %v695, %v672
        %v712 = vadd.f32 %v704, %v708
        %v713 = vadd.f32 %v705, %v709
        %v714 = vadd.f32 %v706, %v710
        %v715 = vadd.f32 %v707, %v711
        %v716 = vadd.f32 %v658, %v700
        %v717 = vadd.f32 %v659, %v701
        %v718 = vadd.f32 %v660, %v702
        %v719 = vadd.f32 %v661, %v703
        %v720 = vadd.f32 %v662, %v712
        %v721 = vadd.f32 %v663, %v713
        %v722 = vadd.f32 %v664, %v714
        %v723 = vadd.f32 %v665, %v715
        %v724 = vld [vmem:[%s354 + $0x6] sm:$0x1]
        %v725 = vld [vmem:[%s354 + $0xe] sm:$0x1]
        %v726 = vld [vmem:[%s386 + $0x6] sm:$0x1]
        %v727 = vld [vmem:[%s386 + $0xe] sm:$0x1]
        %s728 = scalar_lea.vmem %s361, 96 [#allocation3]
        %v729 = vld [vmem:[%s728] sm:$0xff]
        %v730 = vld [vmem:[%s728 + $0x8] sm:$0xff]
        %s731 = scalar_lea.vmem %s361, 224 [#allocation3]
        %v732 = vld [vmem:[%s731] sm:$0xff]
        %v733 = vld [vmem:[%s731 + $0x8] sm:$0xff]
        %v734 = vlaneseq
        %v735 = vshrl.u32 %v734, 7
        %v736 = vsub.s32 0, %v735
        %v737 = vrot.slane %v724, %v736
        %v738 = vlaneseq
        %v739 = vshrl.u32 %v738, 7
        %v740 = vsub.s32 0, %v739
        %v741 = vrot.slane %v725, %v740
        %v742 = vmul.f32 %v737, %v729
        %v743 = vmul.f32 %v737, %v730
        %v744 = vmul.f32 %v741, %v729
        %v745 = vmul.f32 %v741, %v730
        %v746 = vlaneseq
        %v747 = vshrl.u32 %v746, 7
        %v748 = vsub.s32 0, %v747
        %v749 = vrot.slane %v726, %v748
        %v750 = vlaneseq
        %v751 = vshrl.u32 %v750, 7
        %v752 = vsub.s32 0, %v751
        %v753 = vrot.slane %v727, %v752
        %v754 = vmul.f32 %v749, %v732
        %v755 = vmul.f32 %v749, %v733
        %v756 = vmul.f32 %v753, %v732
        %v757 = vmul.f32 %v753, %v733
        %v758 = vsub.f32 %v742, %v754
        %v759 = vsub.f32 %v743, %v755
        %v760 = vsub.f32 %v744, %v756
        %v761 = vsub.f32 %v745, %v757
        %v762 = vmul.f32 %v737, %v732
        %v763 = vmul.f32 %v737, %v733
        %v764 = vmul.f32 %v741, %v732
        %v765 = vmul.f32 %v741, %v733
        %v766 = vmul.f32 %v749, %v729
        %v767 = vmul.f32 %v749, %v730
        %v768 = vmul.f32 %v753, %v729
        %v769 = vmul.f32 %v753, %v730
        %v770 = vadd.f32 %v762, %v766
        %v771 = vadd.f32 %v763, %v767
        %v772 = vadd.f32 %v764, %v768
        %v773 = vadd.f32 %v765, %v769
        %v774 = vadd.f32 %v716, %v758
        %v775 = vadd.f32 %v717, %v759
        %v776 = vadd.f32 %v718, %v760
        %v777 = vadd.f32 %v719, %v761
        %v778 = vadd.f32 %v720, %v770
        %v779 = vadd.f32 %v721, %v771
        %v780 = vadd.f32 %v722, %v772
        %v781 = vadd.f32 %v723, %v773
        %v782 = vld [vmem:[%s354 + $0x7] sm:$0x1]
        %v783 = vld [vmem:[%s354 + $0xf] sm:$0x1]
        %v784 = vld [vmem:[%s386 + $0x7] sm:$0x1]
        %v785 = vld [vmem:[%s386 + $0xf] sm:$0x1]
        %s786 = scalar_lea.vmem %s361, 112 [#allocation3]
        %v787 = vld [vmem:[%s786] sm:$0xff]
        %v788 = vld [vmem:[%s786 + $0x8] sm:$0xff]
        %s789 = scalar_lea.vmem %s361, 240 [#allocation3]
        %v790 = vld [vmem:[%s789] sm:$0xff]
        %v791 = vld [vmem:[%s789 + $0x8] sm:$0xff]
        %v792 = vlaneseq
        %v793 = vshrl.u32 %v792, 7
        %v794 = vsub.s32 0, %v793
        %v795 = vrot.slane %v782, %v794
        %v796 = vlaneseq
        %v797 = vshrl.u32 %v796, 7
        %v798 = vsub.s32 0, %v797
        %v799 = vrot.slane %v783, %v798
        %v800 = vmul.f32 %v795, %v787
        %v801 = vmul.f32 %v795, %v788
        %v802 = vmul.f32 %v799, %v787
        %v803 = vmul.f32 %v799, %v788
        %v804 = vlaneseq
        %v805 = vshrl.u32 %v804, 7
        %v806 = vsub.s32 0, %v805
        %v807 = vrot.slane %v784, %v806
        %v808 = vlaneseq
        %v809 = vshrl.u32 %v808, 7
        %v810 = vsub.s32 0, %v809
        %v811 = vrot.slane %v785, %v810
        %v812 = vmul.f32 %v807, %v790
        %v813 = vmul.f32 %v807, %v791
        %v814 = vmul.f32 %v811, %v790
        %v815 = vmul.f32 %v811, %v791
        %v816 = vsub.f32 %v800, %v812
        %v817 = vsub.f32 %v801, %v813
        %v818 = vsub.f32 %v802, %v814
        %v819 = vsub.f32 %v803, %v815
        %v820 = vmul.f32 %v795, %v790
        %v821 = vmul.f32 %v795, %v791
        %v822 = vmul.f32 %v799, %v790
        %v823 = vmul.f32 %v799, %v791
        %v824 = vmul.f32 %v807, %v787
        %v825 = vmul.f32 %v807, %v788
        %v826 = vmul.f32 %v811, %v787
        %v827 = vmul.f32 %v811, %v788
        %v828 = vadd.f32 %v820, %v824
        %v829 = vadd.f32 %v821, %v825
        %v830 = vadd.f32 %v822, %v826
        %v831 = vadd.f32 %v823, %v827
        %v832 = vadd.f32 %v774, %v816
        %v833 = vadd.f32 %v775, %v817
        %v834 = vadd.f32 %v776, %v818
        %v835 = vadd.f32 %v777, %v819
        %v836 = vadd.f32 %v778, %v828
        %v837 = vadd.f32 %v779, %v829
        %v838 = vadd.f32 %v780, %v830
        %v839 = vadd.f32 %v781, %v831
        %p840 = scmp.eq.s32.totalorder %s18, 0
        // Predicated region
        $region105: #{spectral_filter_layer_forward.1} parent=95 // pred_check
          %p841 = pneg %p840
        $region106: #{spectral_filter_layer_forward.1} parent=95 // pred_check_branch
          %843 = sbr.rel (%p841) target = $region108
        $region107: #{spectral_filter_layer_forward.1} parent=95 // pred_region
          %844 = vst [vmem:[%s382] sm:$0xff] %v832
          %845 = vst [vmem:[%s382 + $0x8] sm:$0xff] %v833
          %846 = vst [vmem:[%s382 + $0x10] sm:$0xff] %v834
          %847 = vst [vmem:[%s382 + $0x18] sm:$0xff] %v835
          %s848 = scalar_lea.vmem %s382, 32 [#allocation4]
          %849 = vst [vmem:[%s848] sm:$0xff] %v836
          %850 = vst [vmem:[%s848 + $0x8] sm:$0xff] %v837
          %851 = vst [vmem:[%s848 + $0x10] sm:$0xff] %v838
          %852 = vst [vmem:[%s848 + $0x18] sm:$0xff] %v839
        $region108: #{spectral_filter_layer_forward.1} parent=95 // pred_fallthru
          _
        %p853 = scmp.gt.s32.totalorder %s18, 0
        // Predicated region
        $region109: #{spectral_filter_layer_forward.1} parent=95 // pred_check
          %p854 = pneg %p853
        $region110: #{spectral_filter_layer_forward.1} parent=95 // pred_check_branch
          %856 = sbr.rel (%p854) target = $region112
        $region111: #{spectral_filter_layer_forward.1} parent=95 // pred_region
          %v857 = vld [vmem:[%s382] sm:$0xff]
          %v858 = vld [vmem:[%s382 + $0x8] sm:$0xff]
          %v859 = vld [vmem:[%s382 + $0x10] sm:$0xff]
          %v860 = vld [vmem:[%s382 + $0x18] sm:$0xff]
          %v861 = vadd.f32 %v857, %v832
          %v862 = vadd.f32 %v858, %v833
          %v863 = vadd.f32 %v859, %v834
          %v864 = vadd.f32 %v860, %v835
          %865 = vst [vmem:[%s382] sm:$0xff] %v861
          %866 = vst [vmem:[%s382 + $0x8] sm:$0xff] %v862
          %867 = vst [vmem:[%s382 + $0x10] sm:$0xff] %v863
          %868 = vst [vmem:[%s382 + $0x18] sm:$0xff] %v864
          %s869 = scalar_lea.vmem %s382, 32 [#allocation4]
          %v870 = vld [vmem:[%s869] sm:$0xff]
          %v871 = vld [vmem:[%s869 + $0x8] sm:$0xff]
          %v872 = vld [vmem:[%s869 + $0x10] sm:$0xff]
          %v873 = vld [vmem:[%s869 + $0x18] sm:$0xff]
          %v874 = vadd.f32 %v870, %v836
          %v875 = vadd.f32 %v871, %v837
          %v876 = vadd.f32 %v872, %v838
          %v877 = vadd.f32 %v873, %v839
          %878 = vst [vmem:[%s869] sm:$0xff] %v874
          %879 = vst [vmem:[%s869 + $0x8] sm:$0xff] %v875
          %880 = vst [vmem:[%s869 + $0x10] sm:$0xff] %v876
          %881 = vst [vmem:[%s869 + $0x18] sm:$0xff] %v877
        $region112: #{spectral_filter_layer_forward.1} parent=95 // pred_fallthru
          _
        %s882 = sand.u32 %s89, 1
        %s883 = sand.u32 %s89, 1
        %s884 = smul.addr %s883, 64
        %s885 = scalar_lea.vmem [#allocation4], %s884
        // Predicated region
        $region113: #{spectral_filter_layer_forward.1} parent=95 // pred_check
          %p886 = pneg %p99
        $region114: #{spectral_filter_layer_forward.1} parent=95 // pred_check_branch
          %888 = sbr.rel (%p886) target = $region116
        $region115: #{spectral_filter_layer_forward.1} parent=95 // pred_region
          %s889 = smul.addr %s17, 8
          %s890 = scalar_lea.vmem %s2, %s889
          // Predicated region
          $region117: #{spectral_filter_layer_forward.1} parent=115 // pred_check
            _
          $region118: #{spectral_filter_layer_forward.1} parent=115 // pred_check_branch
            %892 = sbr.rel (0) target = $region120
          $region119: #{spectral_filter_layer_forward.1} parent=115 // pred_region
            // Predicated region
            $region121: #{spectral_filter_layer_forward.1} parent=119 // pred_check
              _
            $region122: #{spectral_filter_layer_forward.1} parent=119 // pred_check_branch
              %894 = sbr.rel (0) target = $region124
            $region123: #{spectral_filter_layer_forward.1} parent=119 // pred_region
              // Predicated region
              $region136: #{spectral_filter_layer_forward.1} parent=123 // pred_check
                _
              $region137: #{spectral_filter_layer_forward.1} parent=123 // pred_check_branch
                %923 = sbr.rel (0) target = $region139
              $region138: #{spectral_filter_layer_forward.1} parent=123 // pred_region
                loop: start=0, step=1, limit=1
                $region140: #{spectral_filter_layer_forward.1} parent=138 // loop_pre_header
                  _
                $region141: #{spectral_filter_layer_forward.1} parent=138 // loop_header
                  %s925 = sphi 0, %s929
                  %p926 = scmp.ge.s32.totalorder %s925, 1
                  %s930 = sphi %s885, %s885
                  %s931 = sphi %s890, %s890
                $region142: #{spectral_filter_layer_forward.1} parent=138 // loop_header_branch
                  %928 = sbr.rel (%p926) target = $region146
                $region143: #{spectral_filter_layer_forward.1} parent=138 // loop_body
                  %v932 = vld [vmem:[%s930] sm:$0xff]
                  %933 = vst [vmem:[%s931] sm:$0xff] %v932
                  %v934 = vld [vmem:[%s930 + $0x8] sm:$0xff]
                  %935 = vst [vmem:[%s931 + $0x10] sm:$0xff] %v934
                  %v936 = vld [vmem:[%s930 + $0x10] sm:$0xff]
                  %937 = vst [vmem:[%s931 + $0x20] sm:$0xff] %v936
                  %v938 = vld [vmem:[%s930 + $0x18] sm:$0xff]
                  %939 = vst [vmem:[%s931 + $0x30] sm:$0xff] %v938
                  %v940 = vld [vmem:[%s930 + $0x20] sm:$0xff]
                  %941 = vst [vmem:[%s931 + $0x40] sm:$0xff] %v940
                  %v942 = vld [vmem:[%s930 + $0x28] sm:$0xff]
                  %943 = vst [vmem:[%s931 + $0x50] sm:$0xff] %v942
                  %v944 = vld [vmem:[%s930 + $0x30] sm:$0xff]
                  %945 = vst [vmem:[%s931 + $0x60] sm:$0xff] %v944
                  %v946 = vld [vmem:[%s930 + $0x38] sm:$0xff]
                  %947 = vst [vmem:[%s931 + $0x70] sm:$0xff] %v946
                $region144: #{spectral_filter_layer_forward.1} parent=138 // loop_footer
                  %s929 = sadd.s32 1, %s925
                $region145: #{spectral_filter_layer_forward.1} parent=138 // loop_footer_branch
                  %924 = sbr.rel target = $region141
                $region146: #{spectral_filter_layer_forward.1} parent=138 // loop_exit
                  _
              $region139: #{spectral_filter_layer_forward.1} parent=123 // pred_fallthru
                _
              // Predicated region
              $region147: #{spectral_filter_layer_forward.1} parent=123 // pred_check
                _
              $region148: #{spectral_filter_layer_forward.1} parent=123 // pred_check_branch
                %949 = sbr.rel target = $region150
              $region149: #{spectral_filter_layer_forward.1} parent=123 // pred_region
                _
              $region150: #{spectral_filter_layer_forward.1} parent=123 // pred_fallthru
                _
            $region124: #{spectral_filter_layer_forward.1} parent=119 // pred_fallthru
              _
            // Predicated region
            $region125: #{spectral_filter_layer_forward.1} parent=119 // pred_check
              _
            $region126: #{spectral_filter_layer_forward.1} parent=119 // pred_check_branch
              %896 = sbr.rel target = $region128
            $region127: #{spectral_filter_layer_forward.1} parent=119 // pred_region
              loop: start=0, step=1, limit=1
              $region129: #{spectral_filter_layer_forward.1} parent=127 // loop_pre_header
                _
              $region130: #{spectral_filter_layer_forward.1} parent=127 // loop_header
                %s899 = sphi 0, %s903
                %p900 = scmp.ge.s32.totalorder %s899, 1
                %s904 = sphi %s885, %s885
                %s905 = sphi %s890, %s890
              $region131: #{spectral_filter_layer_forward.1} parent=127 // loop_header_branch
                %902 = sbr.rel (%p900) target = $region135
              $region132: #{spectral_filter_layer_forward.1} parent=127 // loop_body
                %v906 = vld [vmem:[%s904] sm:$0xff]
                %907 = vst [vmem:[%s905] sm:$0xff] %v906
                %v908 = vld [vmem:[%s904 + $0x8] sm:$0xff]
                %909 = vst [vmem:[%s905 + $0x10] sm:$0xff] %v908
                %v910 = vld [vmem:[%s904 + $0x10] sm:$0xff]
                %911 = vst [vmem:[%s905 + $0x20] sm:$0xff] %v910
                %v912 = vld [vmem:[%s904 + $0x18] sm:$0xff]
                %913 = vst [vmem:[%s905 + $0x30] sm:$0xff] %v912
                %v914 = vld [vmem:[%s904 + $0x20] sm:$0xff]
                %915 = vst [vmem:[%s905 + $0x40] sm:$0xff] %v914
                %v916 = vld [vmem:[%s904 + $0x28] sm:$0xff]
                %917 = vst [vmem:[%s905 + $0x50] sm:$0xff] %v916
                %v918 = vld [vmem:[%s904 + $0x30] sm:$0xff]
                %919 = vst [vmem:[%s905 + $0x60] sm:$0xff] %v918
                %v920 = vld [vmem:[%s904 + $0x38] sm:$0xff]
                %921 = vst [vmem:[%s905 + $0x70] sm:$0xff] %v920
              $region133: #{spectral_filter_layer_forward.1} parent=127 // loop_footer
                %s903 = sadd.s32 1, %s899
              $region134: #{spectral_filter_layer_forward.1} parent=127 // loop_footer_branch
                %898 = sbr.rel target = $region130
              $region135: #{spectral_filter_layer_forward.1} parent=127 // loop_exit
                _
            $region128: #{spectral_filter_layer_forward.1} parent=119 // pred_fallthru
              _
          $region120: #{spectral_filter_layer_forward.1} parent=115 // pred_fallthru
            _
          %950 = vnop
        $region116: #{spectral_filter_layer_forward.1} parent=95 // pred_fallthru
          _
      $region96: #{spectral_filter_layer_forward.1} parent=5 // pred_fallthru
        _
      %p951 = scmp.le.s32.totalorder 2, %s8
      // Predicated region
      $region151: #{spectral_filter_layer_forward.1} parent=5 // pred_check
        %p952 = pneg %p951
      $region152: #{spectral_filter_layer_forward.1} parent=5 // pred_check_branch
        %954 = sbr.rel (%p952) target = $region154
      $region153: #{spectral_filter_layer_forward.1} parent=5 // pred_region
        %s955 = ssub.s32 %s8, 2
        // Predicated region
        $region155: #{spectral_filter_layer_forward.1} parent=153 // pred_check
          %p956 = pneg %p105
        $region156: #{spectral_filter_layer_forward.1} parent=153 // pred_check_branch
          %958 = sbr.rel (%p956) target = $region158
        $region157: #{spectral_filter_layer_forward.1} parent=153 // pred_region
          %s959 = sand.u32 %s90, 1
          %s960 = sand.u32 %s90, 1
          %s961 = smul.addr %s960, 64
          %s962 = scalar_lea.vmem [#allocation4], %s961
        $region158: #{spectral_filter_layer_forward.1} parent=153 // pred_fallthru
          _
      $region154: #{spectral_filter_layer_forward.1} parent=5 // pred_fallthru
        _
    $region6: #{spectral_filter_layer_forward.1} parent=1 // loop_footer
      %s12 = sadd.s32 1, %s8
    $region7: #{spectral_filter_layer_forward.1} parent=1 // loop_footer_branch
      %7 = sbr.rel target = $region3
    $region8: #{spectral_filter_layer_forward.1} parent=1 // loop_exit
      _

</llo_original>
